<compile_context>
chip_gen: v5e
topology: v5e:2x2
jax: 0.10.0
libtpu: 0.0.40
codegen_flags: <defaults>
</compile_context>

<pallas_src>
import jax
import jax.numpy as jnp
from jax import lax
from jax.experimental import pallas as pl
from jax.experimental.pallas import tpu as pltpu

BN_EPS = 1e-5
LANE = 128


def _round_up(x, m):
    return (x + m - 1) // m * m


def _vmem_limit_bytes():
    # Generation-aware scoped-VMEM limit; our tiles only need ~10 MiB, so stay
    # comfortably inside physical VMEM (64 MiB on v7x, 128 MiB on v5e/v6e).
    try:
        cap = pltpu.get_tpu_info().vmem_capacity_bytes
        return int(min(max(cap - (16 << 20), 32 << 20), 96 << 20))
    except Exception:
        return 48 << 20  # safe on every generation


def _bn_relu(h, gamma, beta):
    """Training-mode BatchNorm1d (biased variance, eps=1e-5) + ReLU, in f32."""
    mean = jnp.mean(h, axis=0, keepdims=True)
    var = jnp.mean(jnp.square(h - mean), axis=0, keepdims=True)
    h = (h - mean) * lax.rsqrt(var + BN_EPS)
    return jnp.maximum(h * gamma + beta, 0.0)


def _matmul_t(a_f32, w_ref):
    """(B, K) f32  x  (N, K) bf16 weight ref (PyTorch layout)  ->  (B, N) f32."""
    return lax.dot_general(
        a_f32.astype(jnp.bfloat16), w_ref[...],
        dimension_numbers=(((1,), (1,)), ((), ())),
        preferred_element_type=jnp.float32)


# ---------------------------------------------------------------------------
# Kernel A: L1 -> BN1 -> ReLU -> L2 -> BN2 -> ReLU, tiled over L2 features.
# x / w1 / bn1 params use constant index maps (DMA'd once, stay resident);
# only the (tn2, n1p) contiguous w2 row slab streams per grid step.  L1 is
# recomputed per step on resident data — negligible next to the DMA.
# ---------------------------------------------------------------------------
def _l1_l2_kernel(x_ref, w1t_ref, g1_ref, beta1_ref,
                  w2_ref, g2_ref, beta2_ref, o_ref):
    h1 = jnp.dot(x_ref[...].astype(jnp.bfloat16), w1t_ref[...],
                 preferred_element_type=jnp.float32)
    h1 = _bn_relu(h1, g1_ref[...], beta1_ref[...])
    h2 = _matmul_t(h1, w2_ref)
    o_ref[...] = _bn_relu(h2, g2_ref[...], beta2_ref[...])


def _l1_l2(x, w1t, g1, beta1, w2, g2, beta2, *, tn2):
    B, d_rep = x.shape
    n1p = w1t.shape[1]
    n2 = w2.shape[0]
    assert w2.shape[1] == n1p and n2 % tn2 == 0
    n_tiles = n2 // tn2
    flops = 2 * B * d_rep * n1p * n_tiles + 2 * B * n1p * n2
    bytes_accessed = (x.size * 4 + w1t.size * 2 + w2.size * 2
                      + 4 * 4 * (n1p + n2) + B * n2 * 4)
    return pl.pallas_call(
        _l1_l2_kernel,
        out_shape=jax.ShapeDtypeStruct((B, n2), jnp.float32),
        grid_spec=pltpu.PrefetchScalarGridSpec(
            num_scalar_prefetch=0,
            grid=(n_tiles,),
            in_specs=[
                pl.BlockSpec((B, d_rep), lambda j: (0, 0)),      # x (resident)
                pl.BlockSpec((d_rep, n1p), lambda j: (0, 0)),    # w1^T (resident)
                pl.BlockSpec((1, n1p), lambda j: (0, 0)),        # bn1 gamma
                pl.BlockSpec((1, n1p), lambda j: (0, 0)),        # bn1 beta
                pl.BlockSpec((tn2, n1p), lambda j: (j, 0)),      # w2 row slab
                pl.BlockSpec((1, tn2), lambda j: (0, j)),        # bn2 gamma tile
                pl.BlockSpec((1, tn2), lambda j: (0, j)),        # bn2 beta tile
            ],
            out_specs=pl.BlockSpec((B, tn2), lambda j: (0, j)),
        ),
        compiler_params=pltpu.CompilerParams(
            dimension_semantics=("parallel",),
            vmem_limit_bytes=_vmem_limit_bytes(),
        ),
        cost_estimate=pl.CostEstimate(
            flops=flops,
            transcendentals=n1p * n_tiles + n2,
            bytes_accessed=bytes_accessed),
    )(x, w1t, g1, beta1, w2, g2, beta2)


# ---------------------------------------------------------------------------
# Kernel B: L3 -> BN3 -> ReLU -> L4 partial products, tiled over L3 features.
# Each grid step consumes a contiguous (tn3, 2048) w3 row slab plus the
# matching (out_dim, tn3) w4 column slab and emits its (B, out_dim) partial
# contribution to y, keeping the grid axis "parallel".
# ---------------------------------------------------------------------------
def _l3_l4_kernel(h2_ref, w3_ref, g3_ref, beta3_ref, w4_ref, o_ref):
    h3 = _matmul_t(h2_ref[...], w3_ref)
    h3 = _bn_relu(h3, g3_ref[...], beta3_ref[...])
    o_ref[...] = _matmul_t(h3, w4_ref)


def _l3_l4_partial(h2, w3, g3, beta3, w4, *, tn3):
    B, n2 = h2.shape
    n3 = w3.shape[0]
    out_dim = w4.shape[0]
    assert w3.shape[1] == n2 and w4.shape[1] == n3 and n3 % tn3 == 0
    n_tiles = n3 // tn3
    flops = 2 * B * n2 * n3 + 2 * B * n3 * out_dim
    bytes_accessed = (h2.size * 4 + w3.size * 2 + w4.size * 2
                      + 2 * 4 * n3 + n_tiles * B * out_dim * 4)
    return pl.pallas_call(
        _l3_l4_kernel,
        out_shape=jax.ShapeDtypeStruct((n_tiles, B, out_dim), jnp.float32),
        grid_spec=pltpu.PrefetchScalarGridSpec(
            num_scalar_prefetch=0,
            grid=(n_tiles,),
            in_specs=[
                pl.BlockSpec((B, n2), lambda j: (0, 0)),          # h2 (resident)
                pl.BlockSpec((tn3, n2), lambda j: (j, 0)),        # w3 row slab
                pl.BlockSpec((1, tn3), lambda j: (0, j)),         # bn3 gamma tile
                pl.BlockSpec((1, tn3), lambda j: (0, j)),         # bn3 beta tile
                pl.BlockSpec((out_dim, tn3), lambda j: (0, j)),   # w4 column slab
            ],
            out_specs=pl.BlockSpec((None, B, out_dim), lambda j: (j, 0, 0)),
        ),
        compiler_params=pltpu.CompilerParams(
            dimension_semantics=("parallel",),
            vmem_limit_bytes=_vmem_limit_bytes(),
        ),
        cost_estimate=pl.CostEstimate(
            flops=flops,
            transcendentals=n3,
            bytes_accessed=bytes_accessed),
    )(h2, w3, g3, beta3, w4)


def mlp_decoder_forward(x, kp, *, tn2=512, tn3=1024):
    h2 = _l1_l2(x, kp["w1t"], kp["g1"], kp["beta1"],
                kp["w2"], kp["g2"], kp["beta2"], tn2=tn2)
    partials = _l3_l4_partial(h2, kp["w3"], kp["g3"], kp["beta3"],
                              kp["w4"], tn3=tn3)
    # Tiny (n_tiles, B, out_dim) reduction + output bias.
    return partials.sum(axis=0) + kp["b4"]


def prepare_kernel_params(p):
    """Cast / pad PyTorch-layout fp32 parameters for the kernels.

    * Weights -> bf16 (forward is HBM weight-streaming bound).
    * 516-wide hidden dim zero-padded to 640 (5*128); padded gamma/beta = 0
      so padded features are exactly 0 after BN+ReLU.
    * b1/b2/b3 dropped (exactly cancelled by training-mode BatchNorm).
    """
    n1, _ = p["w1"].shape
    n1p = _round_up(n1, LANE)
    pad1 = n1p - n1

    w1t = jnp.pad(p["w1"], ((0, pad1), (0, 0))).T.astype(jnp.bfloat16)   # (d_rep, n1p)
    g1 = jnp.pad(p["g1"], ((0, 0), (0, pad1)))
    beta1 = jnp.pad(p["beta1"], ((0, 0), (0, pad1)))
    w2 = jnp.pad(p["w2"], ((0, 0), (0, pad1))).astype(jnp.bfloat16)      # (n2, n1p)
    return {
        "w1t": w1t, "g1": g1, "beta1": beta1,
        "w2": w2, "g2": p["g2"], "beta2": p["beta2"],
        "w3": p["w3"].astype(jnp.bfloat16), "g3": p["g3"], "beta3": p["beta3"],
        "w4": p["w4"].astype(jnp.bfloat16), "b4": p["b4"],
    }


def mlp_decoder_reference(x, params):
    """Pure-JAX reference: the PyTorch forward (training-mode BatchNorm1d),
    using the same bf16 weight storage / f32 accumulation as the kernels."""
    def lin(h, w, b):
        y = lax.dot_general(h.astype(jnp.bfloat16), w.astype(jnp.bfloat16),
                            dimension_numbers=(((1,), (1,)), ((), ())),
                            preferred_element_type=jnp.float32)
        return y + b

    def bn(h, g, b):
        m = h.mean(axis=0, keepdims=True)
        v = jnp.mean((h - m) ** 2, axis=0, keepdims=True)
        return (h - m) * lax.rsqrt(v + BN_EPS) * g + b

    p = params
    h = jnp.maximum(bn(lin(x, p["w1"], p["b1"]), p["g1"], p["beta1"]), 0.0)
    h = jnp.maximum(bn(lin(h, p["w2"], p["b2"]), p["g2"], p["beta2"]), 0.0)
    h = jnp.maximum(bn(lin(h, p["w3"], p["b3"]), p["g3"], p["beta3"]), 0.0)
    return lin(h, p["w4"], p["b4"])


def init_params(key, d_rep, out_dim):
    """fp32 parameters in PyTorch layout: w_i (out_features, in_features)."""
    dims = [d_rep, 516, 2048, 4096, out_dim]
    keys = iter(jax.random.split(key, 16))
    params = {}
    for i in range(4):
        fan_in, fan_out = dims[i], dims[i + 1]
        params[f"w{i+1}"] = (
            jax.random.normal(next(keys), (fan_out, fan_in), jnp.float32) * 0.02)
        params[f"b{i+1}"] = (
            jax.random.normal(next(keys), (1, fan_out), jnp.float32) * 0.01)
    for i, d in enumerate([516, 2048, 4096], start=1):
        params[f"g{i}"] = 1.0 + 0.1 * jax.random.normal(next(keys), (1, d), jnp.float32)
        params[f"beta{i}"] = 0.1 * jax.random.normal(next(keys), (1, d), jnp.float32)
    return params


if __name__ == "__main__":
    key = jax.random.PRNGKey(0)
    k_param, k_x = jax.random.split(key)

    B, d_rep, out_dim = 8, 32, 64
    params = init_params(k_param, d_rep, out_dim)
    kparams = prepare_kernel_params(params)
    x = jax.random.normal(k_x, (B, d_rep), jnp.float32)

    y = jax.block_until_ready(mlp_decoder_forward(x, kparams))
    y_ref = jax.block_until_ready(mlp_decoder_reference(x, params))

    assert y.shape == (B, out_dim), y.shape
    max_err = float(jnp.max(jnp.abs(y - y_ref)))
    assert jnp.allclose(y, y_ref, atol=5e-3, rtol=5e-3), max_err
    print("KERNEL_OK")
</pallas_src>

<mosaic_0001>
module attributes {stable_mosaic.version = 11 : i64} {
  func.func @_l1_l2_kernel(%arg0: i32, %arg1: memref<8x32xf32, #tpu.memory_space<vmem>>, %arg2: memref<32x640xbf16, #tpu.memory_space<vmem>>, %arg3: memref<1x640xf32, #tpu.memory_space<vmem>>, %arg4: memref<1x640xf32, #tpu.memory_space<vmem>>, %arg5: memref<512x640xbf16, #tpu.memory_space<vmem>>, %arg6: memref<1x512xf32, #tpu.memory_space<vmem>>, %arg7: memref<1x512xf32, #tpu.memory_space<vmem>>, %arg8: memref<8x512xf32, #tpu.memory_space<vmem>>) attributes {dimension_semantics = [#tpu.dimension_semantics<parallel>], iteration_bounds = array<i64: 4>, scalar_prefetch = 0 : i64, scratch_operands = 0 : i64, tpu.core_type = #tpu.core_type<tc>, window_params = [{pipeline_mode = #tpu.pipeline_mode<synchronous>, transform_indices = @transform_0, window_bounds = array<i64: 8, 32>}, {pipeline_mode = #tpu.pipeline_mode<synchronous>, transform_indices = @transform_1, window_bounds = array<i64: 32, 640>}, {pipeline_mode = #tpu.pipeline_mode<synchronous>, transform_indices = @transform_2, window_bounds = array<i64: 1, 640>}, {pipeline_mode = #tpu.pipeline_mode<synchronous>, transform_indices = @transform_3, window_bounds = array<i64: 1, 640>}, {transform_indices = @transform_4, window_bounds = array<i64: 512, 640>}, {transform_indices = @transform_5, window_bounds = array<i64: 1, 512>}, {transform_indices = @transform_6, window_bounds = array<i64: 1, 512>}, {transform_indices = @transform_7, window_bounds = array<i64: 8, 512>}]} {
    %c0 = arith.constant 0 : index
    %c0_0 = arith.constant 0 : index
    %0 = vector.load %arg1[%c0, %c0_0] : memref<8x32xf32, #tpu.memory_space<vmem>>, vector<8x32xf32>
    %1 = arith.truncf %0 : vector<8x32xf32> to vector<8x32xbf16>
    %c0_1 = arith.constant 0 : index
    %c0_2 = arith.constant 0 : index
    %2 = vector.load %arg2[%c0_1, %c0_2] : memref<32x640xbf16, #tpu.memory_space<vmem>>, vector<32x640xbf16>
    %cst = arith.constant dense<0.000000e+00> : vector<8x640xf32>
    %3 = tpu.matmul %1, %2, %cst {dimension_numbers = #tpu.dot_dimension_numbers<[1], [0], [0], [1], [0, 0, 1, 1], [], []>} : vector<8x32xbf16>, vector<32x640xbf16>, vector<8x640xf32> -> vector<8x640xf32>
    %c0_3 = arith.constant 0 : index
    %c0_4 = arith.constant 0 : index
    %4 = vector.load %arg3[%c0_3, %c0_4] : memref<1x640xf32, #tpu.memory_space<vmem>>, vector<1x640xf32>
    %c0_5 = arith.constant 0 : index
    %c0_6 = arith.constant 0 : index
    %5 = vector.load %arg4[%c0_5, %c0_6] : memref<1x640xf32, #tpu.memory_space<vmem>>, vector<1x640xf32>
    %cst_7 = arith.constant dense<0.000000e+00> : vector<640xf32>
    %6 = vector.multi_reduction <add>, %3, %cst_7 [0] : vector<8x640xf32> to vector<640xf32>
    %7 = vector.shape_cast %6 : vector<640xf32> to vector<1x640xf32>
    %cst_8 = arith.constant 8.000000e+00 : f32
    %8 = vector.broadcast %cst_8 : f32 to vector<1x640xf32>
    %9 = arith.divf %7, %8 : vector<1x640xf32>
    %10 = vector.broadcast %9 : vector<1x640xf32> to vector<8x640xf32>
    %11 = arith.subf %3, %10 : vector<8x640xf32>
    %12 = arith.mulf %11, %11 : vector<8x640xf32>
    %cst_9 = arith.constant dense<0.000000e+00> : vector<640xf32>
    %13 = vector.multi_reduction <add>, %12, %cst_9 [0] : vector<8x640xf32> to vector<640xf32>
    %14 = vector.shape_cast %13 : vector<640xf32> to vector<1x640xf32>
    %cst_10 = arith.constant 8.000000e+00 : f32
    %15 = vector.broadcast %cst_10 : f32 to vector<1x640xf32>
    %16 = arith.divf %14, %15 : vector<1x640xf32>
    %17 = vector.broadcast %9 : vector<1x640xf32> to vector<8x640xf32>
    %18 = arith.subf %3, %17 : vector<8x640xf32>
    %cst_11 = arith.constant 9.99999974E-6 : f32
    %19 = vector.broadcast %cst_11 : f32 to vector<1x640xf32>
    %20 = arith.addf %16, %19 : vector<1x640xf32>
    %21 = math.rsqrt %20 : vector<1x640xf32>
    %22 = vector.broadcast %21 : vector<1x640xf32> to vector<8x640xf32>
    %23 = arith.mulf %18, %22 : vector<8x640xf32>
    %24 = vector.broadcast %4 : vector<1x640xf32> to vector<8x640xf32>
    %25 = arith.mulf %23, %24 : vector<8x640xf32>
    %26 = vector.broadcast %5 : vector<1x640xf32> to vector<8x640xf32>
    %27 = arith.addf %25, %26 : vector<8x640xf32>
    %cst_12 = arith.constant 0.000000e+00 : f32
    %28 = vector.broadcast %cst_12 : f32 to vector<8x640xf32>
    %29 = arith.maximumf %27, %28 : vector<8x640xf32>
    %30 = arith.truncf %29 : vector<8x640xf32> to vector<8x640xbf16>
    %c0_13 = arith.constant 0 : index
    %c0_14 = arith.constant 0 : index
    %31 = vector.load %arg5[%c0_13, %c0_14] : memref<512x640xbf16, #tpu.memory_space<vmem>>, vector<512x640xbf16>
    %cst_15 = arith.constant dense<0.000000e+00> : vector<8x512xf32>
    %32 = tpu.matmul %30, %31, %cst_15 {dimension_numbers = #tpu.dot_dimension_numbers<[1], [1], [0], [0], [0, 0, 1, 0], [], []>} : vector<8x640xbf16>, vector<512x640xbf16>, vector<8x512xf32> -> vector<8x512xf32>
    %c0_16 = arith.constant 0 : index
    %c0_17 = arith.constant 0 : index
    %33 = vector.load %arg6[%c0_16, %c0_17] : memref<1x512xf32, #tpu.memory_space<vmem>>, vector<1x512xf32>
    %c0_18 = arith.constant 0 : index
    %c0_19 = arith.constant 0 : index
    %34 = vector.load %arg7[%c0_18, %c0_19] : memref<1x512xf32, #tpu.memory_space<vmem>>, vector<1x512xf32>
    %cst_20 = arith.constant dense<0.000000e+00> : vector<512xf32>
    %35 = vector.multi_reduction <add>, %32, %cst_20 [0] : vector<8x512xf32> to vector<512xf32>
    %36 = vector.shape_cast %35 : vector<512xf32> to vector<1x512xf32>
    %cst_21 = arith.constant 8.000000e+00 : f32
    %37 = vector.broadcast %cst_21 : f32 to vector<1x512xf32>
    %38 = arith.divf %36, %37 : vector<1x512xf32>
    %39 = vector.broadcast %38 : vector<1x512xf32> to vector<8x512xf32>
    %40 = arith.subf %32, %39 : vector<8x512xf32>
    %41 = arith.mulf %40, %40 : vector<8x512xf32>
    %cst_22 = arith.constant dense<0.000000e+00> : vector<512xf32>
    %42 = vector.multi_reduction <add>, %41, %cst_22 [0] : vector<8x512xf32> to vector<512xf32>
    %43 = vector.shape_cast %42 : vector<512xf32> to vector<1x512xf32>
    %cst_23 = arith.constant 8.000000e+00 : f32
    %44 = vector.broadcast %cst_23 : f32 to vector<1x512xf32>
    %45 = arith.divf %43, %44 : vector<1x512xf32>
    %46 = vector.broadcast %38 : vector<1x512xf32> to vector<8x512xf32>
    %47 = arith.subf %32, %46 : vector<8x512xf32>
    %cst_24 = arith.constant 9.99999974E-6 : f32
    %48 = vector.broadcast %cst_24 : f32 to vector<1x512xf32>
    %49 = arith.addf %45, %48 : vector<1x512xf32>
    %50 = math.rsqrt %49 : vector<1x512xf32>
    %51 = vector.broadcast %50 : vector<1x512xf32> to vector<8x512xf32>
    %52 = arith.mulf %47, %51 : vector<8x512xf32>
    %53 = vector.broadcast %33 : vector<1x512xf32> to vector<8x512xf32>
    %54 = arith.mulf %52, %53 : vector<8x512xf32>
    %55 = vector.broadcast %34 : vector<1x512xf32> to vector<8x512xf32>
    %56 = arith.addf %54, %55 : vector<8x512xf32>
    %cst_25 = arith.constant 0.000000e+00 : f32
    %57 = vector.broadcast %cst_25 : f32 to vector<8x512xf32>
    %58 = arith.maximumf %56, %57 : vector<8x512xf32>
    %c0_26 = arith.constant 0 : index
    %c0_27 = arith.constant 0 : index
    %59 = vector.load %arg8[%c0_26, %c0_27] : memref<8x512xf32, #tpu.memory_space<vmem>>, vector<8x512xf32>
    tpu.vector_store %arg8[%c0_26, %c0_27], %58 {strides = array<i32>} : memref<8x512xf32, #tpu.memory_space<vmem>>, vector<8x512xf32>,
    return
  }
  func.func @transform_0(%arg0: i32) -> (i32, i32) {
    %c0_i32 = arith.constant 0 : i32
    %c0_i32_0 = arith.constant 0 : i32
    %c0_i32_1 = arith.constant 0 : i32
    return %c0_i32, %c0_i32_0 : i32, i32
  }
  func.func @transform_1(%arg0: i32) -> (i32, i32) {
    %c0_i32 = arith.constant 0 : i32
    %c0_i32_0 = arith.constant 0 : i32
    %c0_i32_1 = arith.constant 0 : i32
    return %c0_i32, %c0_i32_0 : i32, i32
  }
  func.func @transform_2(%arg0: i32) -> (i32, i32) {
    %c0_i32 = arith.constant 0 : i32
    %c0_i32_0 = arith.constant 0 : i32
    %c0_i32_1 = arith.constant 0 : i32
    return %c0_i32, %c0_i32_0 : i32, i32
  }
  func.func @transform_3(%arg0: i32) -> (i32, i32) {
    %c0_i32 = arith.constant 0 : i32
    %c0_i32_0 = arith.constant 0 : i32
    %c0_i32_1 = arith.constant 0 : i32
    return %c0_i32, %c0_i32_0 : i32, i32
  }
  func.func @transform_4(%arg0: i32) -> (i32, i32) {
    %c0_i32 = arith.constant 0 : i32
    %c0_i32_0 = arith.constant 0 : i32
    return %arg0, %c0_i32 : i32, i32
  }
  func.func @transform_5(%arg0: i32) -> (i32, i32) {
    %c0_i32 = arith.constant 0 : i32
    %c0_i32_0 = arith.constant 0 : i32
    return %c0_i32, %arg0 : i32, i32
  }
  func.func @transform_6(%arg0: i32) -> (i32, i32) {
    %c0_i32 = arith.constant 0 : i32
    %c0_i32_0 = arith.constant 0 : i32
    return %c0_i32, %arg0 : i32, i32
  }
  func.func @transform_7(%arg0: i32) -> (i32, i32) {
    %c0_i32 = arith.constant 0 : i32
    %c0_i32_0 = arith.constant 0 : i32
    return %c0_i32, %arg0 : i32, i32
  }
}

</mosaic_0001>

<llo_original>
// kernel: tpu_custom_call.1
$region0: #{tpu_custom_call.1}
  #allocation0 [shape = 'u32[]', space=smem, size = 0x4, offset = 0x4, fixed_abs, tag = 'smem constant byte address 0x4 - core index']
  #allocation1 [shape = 'u32[72,128]{1,0:T(1,128)}', space=vmem, size = 0x9000, scoped, tag = 'internal scratch']
  %s0 = inlined_call_operand.hbm [shape: f32[8,32], index: 0, kind: input, shape index: {}]
  %s1 = inlined_call_operand.hbm [shape: bf16[32,640], index: 1, kind: input, shape index: {}]
  %s2 = inlined_call_operand.hbm [shape: f32[1,640], index: 2, kind: input, shape index: {}]
  %s3 = inlined_call_operand.hbm [shape: f32[1,640], index: 3, kind: input, shape index: {}]
  %s4 = inlined_call_operand.hbm [shape: bf16[2048,640], index: 4, kind: input, shape index: {}]
  %s5 = inlined_call_operand.hbm [shape: f32[1,2048], index: 5, kind: input, shape index: {}]
  %s6 = inlined_call_operand.hbm [shape: f32[1,2048], index: 6, kind: input, shape index: {}]
  %s7 = inlined_call_operand.hbm [shape: f32[8,2048], index: 7, kind: output, shape index: {}]
  %s8 = sld [smem:[#allocation0]]
  $region89: #{tpu_custom_call.1} parent=0
    _
  %s10 = ssub.s32 1, %s8
  %s11 = scalar_select 0, %s10, %s8
  $region1: #{tpu_custom_call.1} parent=0
    #allocation2 [shape = 'u8[4096]{0}', space=vmem, size = 0x1000, scoped, tag = 'input window, operand 0, single buffered']
    #allocation3 [shape = 's32[2]{0}', space=sflag, size = 0x8, scoped, tag = 'scoped memory for tpu_custom_call.1']
    #allocation4 [shape = 's32[2]{0}', space=sflag, size = 0x8, scoped, tag = 'scoped memory for tpu_custom_call.1']
    #allocation5 [shape = 'u8[40960]{0}', space=vmem, size = 0xa000, scoped, tag = 'input window, operand 1, single buffered']
    #allocation6 [shape = 's32[1]{0}', space=sflag, size = 0x4, scoped, tag = 'scoped memory for tpu_custom_call.1']
    #allocation7 [shape = 'u8[2560]{0}', space=vmem, size = 0xc00, scoped, tag = 'input window, operand 2, single buffered']
    #allocation8 [shape = 'u8[2560]{0}', space=vmem, size = 0xc00, scoped, tag = 'input window, operand 3, single buffered']
    #allocation9 [shape = 's32[1]{0}', space=sflag, size = 0x4, scoped, tag = 'scoped memory for tpu_custom_call.1']
    #allocation10 [shape = 'u8[1310720]{0}', space=vmem, size = 0x140000, scoped, tag = 'input window, operand 4']
    #allocation11 [shape = 'u8[4096]{0}', space=vmem, size = 0x1000, scoped, tag = 'input window, operand 5']
    #allocation12 [shape = 'u8[4096]{0}', space=vmem, size = 0x1000, scoped, tag = 'input window, operand 6']
    #allocation13 [shape = 'u8[32768]{0}', space=vmem, size = 0x8000, scoped, tag = 'output window, operand 0']
    %12 = vsyncpa [#allocation3], 0
    %13 = vsyncpa [#allocation6], 0
    %14 = vsyncpa [#allocation9], 0
    %15 = vsyncpa [#allocation4], 0
    %s16 = scalar_lea.sflag [#allocation4], 1
    %17 = vsyncpa %s16, 0
    loop: start=0, step=1, limit=6
    $region2: #{tpu_custom_call.1} parent=1 // loop_pre_header
      _
    $region3: #{tpu_custom_call.1} parent=1 // loop_header
      %s19 = sphi 0, %s23
      %p20 = scmp.ge.s32.totalorder %s19, 6
      %s27 = sphi 0, %s27
      %s29 = sphi 0, %s27
      %s30 = sphi 0, %s29
      %s44 = sphi 0, %s30
      %s48 = sphi 0, %s48
      %s50 = sphi 0, %s48
      %s51 = sphi 0, %s50
      %s65 = sphi 0, %s51
      %s69 = sphi 0, %s69
      %s71 = sphi 0, %s69
      %s72 = sphi 0, %s71
      %s86 = sphi 0, %s72
      %s90 = sphi 0, %s90
      %s92 = sphi 0, %s90
      %s93 = sphi 0, %s92
      %s107 = sphi 0, %s93
      %s113 = sphi 0, %s115
      %s116 = sphi 0, %s113
      %s117 = sphi 0, %s116
      %s133 = sphi 0, %s117
      %s139 = sphi 0, %s141
      %s142 = sphi 0, %s139
      %s143 = sphi 0, %s142
      %s159 = sphi 0, %s143
      %s165 = sphi 0, %s167
      %s168 = sphi 0, %s165
      %s169 = sphi 0, %s168
      %s185 = sphi 0, %s169
      %s191 = sphi 0, %s193
      %s194 = sphi 0, %s191
      %s195 = sphi 0, %s194
      %s211 = sphi 0, %s195
    $region4: #{tpu_custom_call.1} parent=1 // loop_header_branch
      %22 = sbr.rel (%p20) target = $region8
    $region5: #{tpu_custom_call.1} parent=1 // loop_body
      %s24 = ssub.s32 %s19, 1
      %s25 = ssub.s32 %s19, 2
      %s26 = sadd.s32 %s19, 1
      %s28 = sadd.s32 %s27, 1
      %p31 = scmp.eq.s32.totalorder %s19, 3
      %p32 = scmp.ne.s32.totalorder %s27, %s29
      %p33 = scmp.eq.s32.totalorder %s19, 0
      %p34 = por %p32, %p33
      %p35 = scmp.ne.s32.totalorder %s27, %s29
      %p36 = scmp.eq.s32.totalorder %s24, 3
      %p37 = por %p35, %p36
      %p38 = scmp.ne.s32.totalorder %s29, %s30
      %p39 = scmp.eq.s32.totalorder %s24, 0
      %p40 = por %p38, %p39
      %p41 = scmp.ne.s32.totalorder %s29, %s30
      %p42 = scmp.eq.s32.totalorder %s25, 3
      %p43 = por %p41, %p42
      %p45 = scmp.ne.s32.totalorder %s30, %s44
      %p46 = scmp.eq.s32.totalorder %s25, 0
      %p47 = por %p45, %p46
      %s49 = sadd.s32 %s48, 1
      %p52 = scmp.eq.s32.totalorder %s19, 3
      %p53 = scmp.ne.s32.totalorder %s48, %s50
      %p54 = scmp.eq.s32.totalorder %s19, 0
      %p55 = por %p53, %p54
      %p56 = scmp.ne.s32.totalorder %s48, %s50
      %p57 = scmp.eq.s32.totalorder %s24, 3
      %p58 = por %p56, %p57
      %p59 = scmp.ne.s32.totalorder %s50, %s51
      %p60 = scmp.eq.s32.totalorder %s24, 0
      %p61 = por %p59, %p60
      %p62 = scmp.ne.s32.totalorder %s50, %s51
      %p63 = scmp.eq.s32.totalorder %s25, 3
      %p64 = por %p62, %p63
      %p66 = scmp.ne.s32.totalorder %s51, %s65
      %p67 = scmp.eq.s32.totalorder %s25, 0
      %p68 = por %p66, %p67
      %s70 = sadd.s32 %s69, 1
      %p73 = scmp.eq.s32.totalorder %s19, 3
      %p74 = scmp.ne.s32.totalorder %s69, %s71
      %p75 = scmp.eq.s32.totalorder %s19, 0
      %p76 = por %p74, %p75
      %p77 = scmp.ne.s32.totalorder %s69, %s71
      %p78 = scmp.eq.s32.totalorder %s24, 3
      %p79 = por %p77, %p78
      %p80 = scmp.ne.s32.totalorder %s71, %s72
      %p81 = scmp.eq.s32.totalorder %s24, 0
      %p82 = por %p80, %p81
      %p83 = scmp.ne.s32.totalorder %s71, %s72
      %p84 = scmp.eq.s32.totalorder %s25, 3
      %p85 = por %p83, %p84
      %p87 = scmp.ne.s32.totalorder %s72, %s86
      %p88 = scmp.eq.s32.totalorder %s25, 0
      %p89 = por %p87, %p88
      %s91 = sadd.s32 %s90, 1
      %p94 = scmp.eq.s32.totalorder %s19, 3
      %p95 = scmp.ne.s32.totalorder %s90, %s92
      %p96 = scmp.eq.s32.totalorder %s19, 0
      %p97 = por %p95, %p96
      %p98 = scmp.ne.s32.totalorder %s90, %s92
      %p99 = scmp.eq.s32.totalorder %s24, 3
      %p100 = por %p98, %p99
      %p101 = scmp.ne.s32.totalorder %s92, %s93
      %p102 = scmp.eq.s32.totalorder %s24, 0
      %p103 = por %p101, %p102
      %p104 = scmp.ne.s32.totalorder %s92, %s93
      %p105 = scmp.eq.s32.totalorder %s25, 3
      %p106 = por %p104, %p105
      %p108 = scmp.ne.s32.totalorder %s93, %s107
      %p109 = scmp.eq.s32.totalorder %s25, 0
      %p110 = por %p108, %p109
      %s111 = ssub.s32 %s19, %s26
      %p112 = scmp.eq.s32.totalorder %s111, 0
      %s114 = sadd.s32 %s113, 1
      %s115 = scalar_select %p112, %s113, %s114
      %p118 = pneg %p112
      %p119 = scmp.eq.s32.totalorder %s19, 3
      %p120 = por %p118, %p119
      %p121 = scmp.ne.s32.totalorder %s113, %s116
      %p122 = scmp.eq.s32.totalorder %s19, 0
      %p123 = por %p121, %p122
      %p124 = scmp.ne.s32.totalorder %s113, %s116
      %p125 = scmp.eq.s32.totalorder %s24, 3
      %p126 = por %p124, %p125
      %p127 = scmp.ne.s32.totalorder %s116, %s117
      %p128 = scmp.eq.s32.totalorder %s24, 0
      %p129 = por %p127, %p128
      %p130 = scmp.ne.s32.totalorder %s116, %s117
      %p131 = scmp.eq.s32.totalorder %s25, 3
      %p132 = por %p130, %p131
      %p134 = scmp.ne.s32.totalorder %s117, %s133
      %p135 = scmp.eq.s32.totalorder %s25, 0
      %p136 = por %p134, %p135
      %s137 = ssub.s32 %s19, %s26
      %p138 = scmp.eq.s32.totalorder %s137, 0
      %s140 = sadd.s32 %s139, 1
      %s141 = scalar_select %p138, %s139, %s140
      %p144 = pneg %p138
      %p145 = scmp.eq.s32.totalorder %s19, 3
      %p146 = por %p144, %p145
      %p147 = scmp.ne.s32.totalorder %s139, %s142
      %p148 = scmp.eq.s32.totalorder %s19, 0
      %p149 = por %p147, %p148
      %p150 = scmp.ne.s32.totalorder %s139, %s142
      %p151 = scmp.eq.s32.totalorder %s24, 3
      %p152 = por %p150, %p151
      %p153 = scmp.ne.s32.totalorder %s142, %s143
      %p154 = scmp.eq.s32.totalorder %s24, 0
      %p155 = por %p153, %p154
      %p156 = scmp.ne.s32.totalorder %s142, %s143
      %p157 = scmp.eq.s32.totalorder %s25, 3
      %p158 = por %p156, %p157
      %p160 = scmp.ne.s32.totalorder %s143, %s159
      %p161 = scmp.eq.s32.totalorder %s25, 0
      %p162 = por %p160, %p161
      %s163 = ssub.s32 %s19, %s26
      %p164 = scmp.eq.s32.totalorder %s163, 0
      %s166 = sadd.s32 %s165, 1
      %s167 = scalar_select %p164, %s165, %s166
      %p170 = pneg %p164
      %p171 = scmp.eq.s32.totalorder %s19, 3
      %p172 = por %p170, %p171
      %p173 = scmp.ne.s32.totalorder %s165, %s168
      %p174 = scmp.eq.s32.totalorder %s19, 0
      %p175 = por %p173, %p174
      %p176 = scmp.ne.s32.totalorder %s165, %s168
      %p177 = scmp.eq.s32.totalorder %s24, 3
      %p178 = por %p176, %p177
      %p179 = scmp.ne.s32.totalorder %s168, %s169
      %p180 = scmp.eq.s32.totalorder %s24, 0
      %p181 = por %p179, %p180
      %p182 = scmp.ne.s32.totalorder %s168, %s169
      %p183 = scmp.eq.s32.totalorder %s25, 3
      %p184 = por %p182, %p183
      %p186 = scmp.ne.s32.totalorder %s169, %s185
      %p187 = scmp.eq.s32.totalorder %s25, 0
      %p188 = por %p186, %p187
      %s189 = ssub.s32 %s19, %s26
      %p190 = scmp.eq.s32.totalorder %s189, 0
      %s192 = sadd.s32 %s191, 1
      %s193 = scalar_select %p190, %s191, %s192
      %p196 = pneg %p190
      %p197 = scmp.eq.s32.totalorder %s19, 3
      %p198 = por %p196, %p197
      %p199 = scmp.ne.s32.totalorder %s191, %s194
      %p200 = scmp.eq.s32.totalorder %s19, 0
      %p201 = por %p199, %p200
      %p202 = scmp.ne.s32.totalorder %s191, %s194
      %p203 = scmp.eq.s32.totalorder %s24, 3
      %p204 = por %p202, %p203
      %p205 = scmp.ne.s32.totalorder %s194, %s195
      %p206 = scmp.eq.s32.totalorder %s24, 0
      %p207 = por %p205, %p206
      %p208 = scmp.ne.s32.totalorder %s194, %s195
      %p209 = scmp.eq.s32.totalorder %s25, 3
      %p210 = por %p208, %p209
      %p212 = scmp.ne.s32.totalorder %s195, %s211
      %p213 = scmp.eq.s32.totalorder %s25, 0
      %p214 = por %p212, %p213
      %p215 = scmp.le.s32.totalorder 1, %s19
      %p216 = scmp.lt.s32.totalorder %s19, 5
      %p217 = pnand %p215, %p216
      %p218 = pneg %p217
      // Predicated region
      $region9: #{tpu_custom_call.1} parent=5 // pred_check
        _
      $region10: #{tpu_custom_call.1} parent=5 // pred_check_branch
        %220 = sbr.rel (%p217) target = $region12
      $region11: #{tpu_custom_call.1} parent=5 // pred_region
        %s221 = ssub.s32 %s19, 1
        // Predicated region
        $region13: #{tpu_custom_call.1} parent=11 // pred_check
          %p222 = pneg %p40
        $region14: #{tpu_custom_call.1} parent=11 // pred_check_branch
          %224 = sbr.rel (%p222) target = $region16
        $region15: #{tpu_custom_call.1} parent=11 // pred_region
          %226 = vsyncadd [#allocation3], 0
          %s228 = sshll.u32 %s0, 4
          %s229 = int_to_ptr.hbm [resolvable:$true] %s228
          %s230 = sshll.u32 [#allocation2], 4
          %s231 = int_to_ptr.vmem [resolvable:$true] %s230
          %233 = dma.hbm_to_vmem [thread:$0]  %s229, 128, %s231, [#allocation3]
        $region16: #{tpu_custom_call.1} parent=11 // pred_fallthru
          _
        // Predicated region
        $region17: #{tpu_custom_call.1} parent=11 // pred_check
          %p234 = pneg %p61
        $region18: #{tpu_custom_call.1} parent=11 // pred_check_branch
          %236 = sbr.rel (%p234) target = $region20
        $region19: #{tpu_custom_call.1} parent=11 // pred_region
          %238 = vsyncadd [#allocation6], 0
          %s239 = sshll.u32 %s1, 4
          %s240 = int_to_ptr.hbm [resolvable:$true] %s239
          %s241 = sshll.u32 [#allocation5], 4
          %s242 = int_to_ptr.vmem [resolvable:$true] %s241
          %247 = dma.hbm_to_vmem [thread:$0]  %s240, 1280, %s242, [#allocation6], 320, 320, 20
        $region20: #{tpu_custom_call.1} parent=11 // pred_fallthru
          _
        // Predicated region
        $region21: #{tpu_custom_call.1} parent=11 // pred_check
          %p248 = pneg %p82
        $region22: #{tpu_custom_call.1} parent=11 // pred_check_branch
          %250 = sbr.rel (%p248) target = $region24
        $region23: #{tpu_custom_call.1} parent=11 // pred_region
          %252 = vsyncadd [#allocation6], 0
          %s254 = sshll.u32 %s2, 4
          %s255 = int_to_ptr.hbm [resolvable:$true] %s254
          %s256 = sshll.u32 [#allocation7], 4
          %s257 = int_to_ptr.vmem [resolvable:$true] %s256
          %259 = dma.hbm_to_vmem [thread:$0]  %s255, 80, %s257, [#allocation6]
        $region24: #{tpu_custom_call.1} parent=11 // pred_fallthru
          _
        // Predicated region
        $region25: #{tpu_custom_call.1} parent=11 // pred_check
          %p260 = pneg %p103
        $region26: #{tpu_custom_call.1} parent=11 // pred_check_branch
          %262 = sbr.rel (%p260) target = $region28
        $region27: #{tpu_custom_call.1} parent=11 // pred_region
          %264 = vsyncadd [#allocation9], 0
          %s266 = sshll.u32 %s3, 4
          %s267 = int_to_ptr.hbm [resolvable:$true] %s266
          %s268 = sshll.u32 [#allocation8], 4
          %s269 = int_to_ptr.vmem [resolvable:$true] %s268
          %271 = dma.hbm_to_vmem [thread:$0]  %s267, 80, %s269, [#allocation9]
        $region28: #{tpu_custom_call.1} parent=11 // pred_fallthru
          _
      $region12: #{tpu_custom_call.1} parent=5 // pred_fallthru
        _
      %p272 = scmp.lt.s32.totalorder %s19, 4
      // Predicated region
      $region29: #{tpu_custom_call.1} parent=5 // pred_check
        %p273 = pneg %p272
      $region30: #{tpu_custom_call.1} parent=5 // pred_check_branch
        %275 = sbr.rel (%p273) target = $region32
      $region31: #{tpu_custom_call.1} parent=5 // pred_region
        // Predicated region
        $region33: #{tpu_custom_call.1} parent=31 // pred_check
          %p276 = pneg %p123
        $region34: #{tpu_custom_call.1} parent=31 // pred_check_branch
          %278 = sbr.rel (%p276) target = $region36
        $region35: #{tpu_custom_call.1} parent=31 // pred_region
          %s279 = sand.u32 %s19, 1
          %s280 = scalar_lea.sflag [#allocation3], %s279
          %s281 = sand.u32 %s113, 1
          %s282 = smul.addr %s281, 1280
          %s283 = scalar_lea.vmem [#allocation10], %s282
          %s284 = smul.u32 64, %s19
          %286 = vsyncadd %s280, 0
          %s287 = smul.addr %s284, 5
          %s288 = smul.addr %s287, 4
          %s289 = scalar_lea.hbm %s4, %s288
          %s290 = sshll.u32 %s289, 4
          %s291 = int_to_ptr.hbm [resolvable:$true] %s290
          %s292 = sshll.u32 %s283, 4
          %s293 = int_to_ptr.vmem [resolvable:$true] %s292
          %298 = dma.hbm_to_vmem [thread:$0]  %s291, 20480, %s293, %s280, 320, 320, 20
        $region36: #{tpu_custom_call.1} parent=31 // pred_fallthru
          _
        // Predicated region
        $region37: #{tpu_custom_call.1} parent=31 // pred_check
          %p299 = pneg %p149
        $region38: #{tpu_custom_call.1} parent=31 // pred_check_branch
          %301 = sbr.rel (%p299) target = $region40
        $region39: #{tpu_custom_call.1} parent=31 // pred_region
          %s302 = sand.u32 %s19, 1
          %s303 = scalar_lea.sflag [#allocation3], %s302
          %s304 = sand.u32 %s139, 1
          %s305 = smul.addr %s304, 4
          %s306 = scalar_lea.vmem [#allocation11], %s305
          %s307 = smul.u32 4, %s19
          %309 = vsyncadd %s303, 0
          %s310 = scalar_lea.hbm %s5, %s307
          %s312 = sshll.u32 %s310, 4
          %s313 = int_to_ptr.hbm [resolvable:$true] %s312
          %s314 = sshll.u32 %s306, 4
          %s315 = int_to_ptr.vmem [resolvable:$true] %s314
          %317 = dma.hbm_to_vmem [thread:$0]  %s313, 64, %s315, %s303
        $region40: #{tpu_custom_call.1} parent=31 // pred_fallthru
          _
        // Predicated region
        $region41: #{tpu_custom_call.1} parent=31 // pred_check
          %p318 = pneg %p175
        $region42: #{tpu_custom_call.1} parent=31 // pred_check_branch
          %320 = sbr.rel (%p318) target = $region44
        $region43: #{tpu_custom_call.1} parent=31 // pred_region
          %s321 = sand.u32 %s19, 1
          %s322 = scalar_lea.sflag [#allocation3], %s321
          %s323 = sand.u32 %s165, 1
          %s324 = smul.addr %s323, 4
          %s325 = scalar_lea.vmem [#allocation12], %s324
          %s326 = smul.u32 4, %s19
          %328 = vsyncadd %s322, 0
          %s329 = scalar_lea.hbm %s6, %s326
          %s331 = sshll.u32 %s329, 4
          %s332 = int_to_ptr.hbm [resolvable:$true] %s331
          %s333 = sshll.u32 %s325, 4
          %s334 = int_to_ptr.vmem [resolvable:$true] %s333
          %336 = dma.hbm_to_vmem [thread:$0]  %s332, 64, %s334, %s322
        $region44: #{tpu_custom_call.1} parent=31 // pred_fallthru
          _
      $region32: #{tpu_custom_call.1} parent=5 // pred_fallthru
        _
      %p337 = scmp.le.s32.totalorder 1, %s19
      %p338 = scmp.lt.s32.totalorder %s19, 5
      %p339 = pnand %p337, %p338
      %p340 = pneg %p339
      // Predicated region
      $region45: #{tpu_custom_call.1} parent=5 // pred_check
        _
      $region46: #{tpu_custom_call.1} parent=5 // pred_check_branch
        %342 = sbr.rel (%p339) target = $region48
      $region47: #{tpu_custom_call.1} parent=5 // pred_region
        %s343 = ssub.s32 %s19, 1
        // Predicated region
        $region49: #{tpu_custom_call.1} parent=47 // pred_check
          %p344 = pneg %p40
        $region50: #{tpu_custom_call.1} parent=47 // pred_check_branch
          %346 = sbr.rel (%p344) target = $region52
        $region51: #{tpu_custom_call.1} parent=47 // pred_region
          %348 = dma.done [#allocation3], 128
        $region52: #{tpu_custom_call.1} parent=47 // pred_fallthru
          _
        // Predicated region
        $region53: #{tpu_custom_call.1} parent=47 // pred_check
          %p349 = pneg %p61
        $region54: #{tpu_custom_call.1} parent=47 // pred_check_branch
          %351 = sbr.rel (%p349) target = $region56
        $region55: #{tpu_custom_call.1} parent=47 // pred_region
          %353 = dma.done [#allocation6], 1280
        $region56: #{tpu_custom_call.1} parent=47 // pred_fallthru
          _
        // Predicated region
        $region57: #{tpu_custom_call.1} parent=47 // pred_check
          %p354 = pneg %p82
        $region58: #{tpu_custom_call.1} parent=47 // pred_check_branch
          %356 = sbr.rel (%p354) target = $region60
        $region59: #{tpu_custom_call.1} parent=47 // pred_region
          %358 = dma.done [#allocation6], 80
        $region60: #{tpu_custom_call.1} parent=47 // pred_fallthru
          _
        // Predicated region
        $region61: #{tpu_custom_call.1} parent=47 // pred_check
          %p359 = pneg %p103
        $region62: #{tpu_custom_call.1} parent=47 // pred_check_branch
          %361 = sbr.rel (%p359) target = $region64
        $region63: #{tpu_custom_call.1} parent=47 // pred_region
          %363 = dma.done [#allocation9], 80
        $region64: #{tpu_custom_call.1} parent=47 // pred_fallthru
          _
        %s364 = sand.u32 %s24, 1
        %s365 = scalar_lea.sflag [#allocation3], %s364
        %s366 = sand.u32 %s116, 1
        %s367 = smul.addr %s366, 1280
        %s368 = scalar_lea.vmem [#allocation10], %s367
        // Predicated region
        $region65: #{tpu_custom_call.1} parent=47 // pred_check
          %p369 = pneg %p129
        $region66: #{tpu_custom_call.1} parent=47 // pred_check_branch
          %371 = sbr.rel (%p369) target = $region68
        $region67: #{tpu_custom_call.1} parent=47 // pred_region
          %373 = dma.done %s365, 20480
        $region68: #{tpu_custom_call.1} parent=47 // pred_fallthru
          _
        %s374 = sand.u32 %s24, 1
        %s375 = scalar_lea.sflag [#allocation3], %s374
        %s376 = sand.u32 %s142, 1
        %s377 = smul.addr %s376, 4
        %s378 = scalar_lea.vmem [#allocation11], %s377
        // Predicated region
        $region69: #{tpu_custom_call.1} parent=47 // pred_check
          %p379 = pneg %p155
        $region70: #{tpu_custom_call.1} parent=47 // pred_check_branch
          %381 = sbr.rel (%p379) target = $region72
        $region71: #{tpu_custom_call.1} parent=47 // pred_region
          %383 = dma.done %s375, 64
        $region72: #{tpu_custom_call.1} parent=47 // pred_fallthru
          _
        %s384 = sand.u32 %s24, 1
        %s385 = scalar_lea.sflag [#allocation3], %s384
        %s386 = sand.u32 %s168, 1
        %s387 = smul.addr %s386, 4
        %s388 = scalar_lea.vmem [#allocation12], %s387
        // Predicated region
        $region73: #{tpu_custom_call.1} parent=47 // pred_check
          %p389 = pneg %p181
        $region74: #{tpu_custom_call.1} parent=47 // pred_check_branch
          %391 = sbr.rel (%p389) target = $region76
        $region75: #{tpu_custom_call.1} parent=47 // pred_region
          %393 = dma.done %s385, 64
        $region76: #{tpu_custom_call.1} parent=47 // pred_fallthru
          _
        %p394 = pneg %p40
        %p395 = pneg %p37
        %p396 = pneg %p61
        %p397 = pneg %p58
        %p398 = pneg %p82
        %p399 = pneg %p79
        %p400 = pneg %p103
        %p401 = pneg %p100
        %s402 = sand.u32 %s24, 1
        %s403 = scalar_lea.sflag [#allocation3], %s402
        %s404 = sand.u32 %s116, 1
        %s405 = smul.addr %s404, 1280
        %s406 = scalar_lea.vmem [#allocation10], %s405
        %p407 = pneg %p129
        %p408 = pneg %p126
        %s409 = sand.u32 %s24, 1
        %s410 = scalar_lea.sflag [#allocation3], %s409
        %s411 = sand.u32 %s142, 1
        %s412 = smul.addr %s411, 4
        %s413 = scalar_lea.vmem [#allocation11], %s412
        %p414 = pneg %p155
        %p415 = pneg %p152
        %s416 = sand.u32 %s24, 1
        %s417 = scalar_lea.sflag [#allocation3], %s416
        %s418 = sand.u32 %s168, 1
        %s419 = smul.addr %s418, 4
        %s420 = scalar_lea.vmem [#allocation12], %s419
        %p421 = pneg %p181
        %p422 = pneg %p178
        %p423 = pneg %p207
        %p424 = pneg %p204
        %s425 = sand.u32 %s194, 1
        %s426 = scalar_lea.sflag [#allocation4], %s425
        %s427 = sand.u32 %s194, 1
        %s428 = smul.addr %s427, 32
        %s429 = scalar_lea.vmem [#allocation13], %s428
        %s430 = smul.u32 64, %s24
        %s431 = smul.u32 4, %s24
        %s432 = smul.u32 4, %s24
        %s433 = smul.u32 4, %s24
        %v435 = vld [vmem:[#allocation2] sm:$0xff]
        %v436 = vpack.c.bf16 %v435, %v435
        %v437 = vld [vmem:[#allocation5] sm:$0xff]
        %v438 = vld [vmem:[#allocation5 + $0x8] sm:$0xff]
        %v439 = vld [vmem:[#allocation5 + $0x10] sm:$0xf]
        %v440 = vld [vmem:[#allocation5 + $0x14] sm:$0xff]
        %v441 = vld [vmem:[#allocation5 + $0x1c] sm:$0xff]
        %v442 = vld [vmem:[#allocation5 + $0x24] sm:$0xf]
        %v443 = vld [vmem:[#allocation5 + $0x28] sm:$0xff]
        %v444 = vld [vmem:[#allocation5 + $0x30] sm:$0xff]
        %v445 = vld [vmem:[#allocation5 + $0x38] sm:$0xf]
        %v446 = vld [vmem:[#allocation5 + $0x3c] sm:$0xff]
        %v447 = vld [vmem:[#allocation5 + $0x44] sm:$0xff]
        %v448 = vld [vmem:[#allocation5 + $0x4c] sm:$0xf]
        %v461 = vunpack.c.l.b16 %v437
        %v462 = vunpack.c.h.b16 %v437
        %v463 = vunpack.c.l.b16 %v438
        %v464 = vunpack.c.h.b16 %v438
        %v465 = vunpack.c.l.b16 %v439
        %v466 = vunpack.c.l.b16 %v440
        %v467 = vunpack.c.h.b16 %v440
        %v468 = vunpack.c.l.b16 %v441
        %v469 = vunpack.c.h.b16 %v441
        %v470 = vunpack.c.l.b16 %v442
        %v471 = vunpack.c.l.b16 %v443
        %v472 = vunpack.c.h.b16 %v443
        %v473 = vunpack.c.l.b16 %v444
        %v474 = vunpack.c.h.b16 %v444
        %v475 = vunpack.c.l.b16 %v445
        %v476 = vunpack.c.l.b16 %v446
        %v477 = vunpack.c.h.b16 %v446
        %v478 = vunpack.c.l.b16 %v447
        %v479 = vunpack.c.h.b16 %v447
        %v480 = vunpack.c.l.b16 %v448
        %v481 = vpack.c.b16 %v466, %v461
        %v482 = vpack.c.b16 %v467, %v462
        %v483 = vpack.c.b16 %v468, %v463
        %v484 = vpack.c.b16 %v469, %v464
        %v485 = vpack.c.b16 %v470, %v465
        %v486 = vpack.c.b16 %v476, %v471
        %v487 = vpack.c.b16 %v477, %v472
        %v488 = vpack.c.b16 %v478, %v473
        %v489 = vpack.c.b16 %v479, %v474
        %v490 = vpack.c.b16 %v480, %v475
        %vm501 = vcmask 261120
        %v503 = vsel %vm501, %v436, 0
        %505 = vmatpush.bf16.msra.mxu0 0
        %506 = vmatpush.bf16.msra.mxu0 0
        %507 = vmatpush.bf16.msra.mxu0 0
        %508 = vmatpush.bf16.msra.mxu0 0
        %509 = vmatpush.bf16.msra.mxu0 0
        %510 = vmatpush.bf16.msra.mxu0 0
        %511 = vmatpush.bf16.msra.mxu0 %v486
        %512 = vmatpush.bf16.msra.mxu0 %v481
        %513 = vmatmul.bf16.gmra.mxu0 %v503
        %v514 = vpop.f32.mrf.mxu0
        %v515 = vadd.f32 0.0, %v514
        %v516 = vpop.f32.mrf.mxu0
        %517 = vdwg.mxu0
        %518 = vmatpush.bf16.msra.mxu0 0
        %519 = vmatpush.bf16.msra.mxu0 0
        %520 = vmatpush.bf16.msra.mxu0 0
        %521 = vmatpush.bf16.msra.mxu0 0
        %522 = vmatpush.bf16.msra.mxu0 0
        %523 = vmatpush.bf16.msra.mxu0 0
        %524 = vmatpush.bf16.msra.mxu0 %v487
        %525 = vmatpush.bf16.msra.mxu0 %v482
        %526 = vmatmul.bf16.gmra.mxu0 %v503
        %v527 = vpop.f32.mrf.mxu0
        %v528 = vadd.f32 0.0, %v527
        %v529 = vpop.f32.mrf.mxu0
        %530 = vdwg.mxu0
        %531 = vmatpush.bf16.msra.mxu0 0
        %532 = vmatpush.bf16.msra.mxu0 0
        %533 = vmatpush.bf16.msra.mxu0 0
        %534 = vmatpush.bf16.msra.mxu0 0
        %535 = vmatpush.bf16.msra.mxu0 0
        %536 = vmatpush.bf16.msra.mxu0 0
        %537 = vmatpush.bf16.msra.mxu0 %v488
        %538 = vmatpush.bf16.msra.mxu0 %v483
        %539 = vmatmul.bf16.gmra.mxu0 %v503
        %v540 = vpop.f32.mrf.mxu0
        %v541 = vadd.f32 0.0, %v540
        %v542 = vpop.f32.mrf.mxu0
        %543 = vdwg.mxu0
        %544 = vmatpush.bf16.msra.mxu0 0
        %545 = vmatpush.bf16.msra.mxu0 0
        %546 = vmatpush.bf16.msra.mxu0 0
        %547 = vmatpush.bf16.msra.mxu0 0
        %548 = vmatpush.bf16.msra.mxu0 0
        %549 = vmatpush.bf16.msra.mxu0 0
        %550 = vmatpush.bf16.msra.mxu0 %v489
        %551 = vmatpush.bf16.msra.mxu0 %v484
        %552 = vmatmul.bf16.gmra.mxu0 %v503
        %v553 = vpop.f32.mrf.mxu0
        %v554 = vadd.f32 0.0, %v553
        %v555 = vpop.f32.mrf.mxu0
        %556 = vdwg.mxu0
        %557 = vmatpush.bf16.msra.mxu0 0
        %558 = vmatpush.bf16.msra.mxu0 0
        %559 = vmatpush.bf16.msra.mxu0 0
        %560 = vmatpush.bf16.msra.mxu0 0
        %561 = vmatpush.bf16.msra.mxu0 0
        %562 = vmatpush.bf16.msra.mxu0 0
        %563 = vmatpush.bf16.msra.mxu0 %v490
        %564 = vmatpush.bf16.msra.mxu0 %v485
        %565 = vmatmul.bf16.gmra.mxu0 %v503
        %v566 = vpop.f32.mrf.mxu0
        %v567 = vadd.f32 0.0, %v566
        %v568 = vpop.f32.mrf.mxu0
        %569 = vdwg.mxu0
        %v570 = vld [vmem:[#allocation7] sm:$0x1f]
        %v571 = vld [vmem:[#allocation8] sm:$0x1f]
        %v572 = vrot.slane %v515, 4
        %v573 = vadd.f32 %v515, %v572
        %v574 = vrot.slane %v573, 2
        %v575 = vadd.f32 %v573, %v574
        %v576 = vrot.slane %v575, 1
        %v577 = vadd.f32 %v575, %v576
        %v578 = vrot.slane %v528, 4
        %v579 = vadd.f32 %v528, %v578
        %v580 = vrot.slane %v579, 2
        %v581 = vadd.f32 %v579, %v580
        %v582 = vrot.slane %v581, 1
        %v583 = vadd.f32 %v581, %v582
        %v584 = vrot.slane %v541, 4
        %v585 = vadd.f32 %v541, %v584
        %v586 = vrot.slane %v585, 2
        %v587 = vadd.f32 %v585, %v586
        %v588 = vrot.slane %v587, 1
        %v589 = vadd.f32 %v587, %v588
        %v590 = vrot.slane %v554, 4
        %v591 = vadd.f32 %v554, %v590
        %v592 = vrot.slane %v591, 2
        %v593 = vadd.f32 %v591, %v592
        %v594 = vrot.slane %v593, 1
        %v595 = vadd.f32 %v593, %v594
        %v596 = vrot.slane %v567, 4
        %v597 = vadd.f32 %v567, %v596
        %v598 = vrot.slane %v597, 2
        %v599 = vadd.f32 %v597, %v598
        %v600 = vrot.slane %v599, 1
        %v601 = vadd.f32 %v599, %v600
        %v602 = vrcp.pop 8.0
        %v603 = vmul.f32 8.0, %v602
        %v604 = vsub.f32 1.0, %v603
        %v605 = vmul.f32 %v602, %v604
        %v606 = vadd.f32 %v602, %v605
        %vm607 = vweird.f32 %v602
        %v608 = vsel %vm607, %v602, %v606
        %v609 = vmul.f32 %v577, %v608
        %v610 = vmul.f32 %v583, %v608
        %v611 = vmul.f32 %v589, %v608
        %v612 = vmul.f32 %v595, %v608
        %v613 = vmul.f32 %v601, %v608
        %v614 = vsub.f32 %v515, %v609
        %v615 = vsub.f32 %v528, %v610
        %v616 = vsub.f32 %v541, %v611
        %v617 = vsub.f32 %v554, %v612
        %v618 = vsub.f32 %v567, %v613
        %v619 = vmul.f32 %v614, %v614
        %v620 = vmul.f32 %v615, %v615
        %v621 = vmul.f32 %v616, %v616
        %v622 = vmul.f32 %v617, %v617
        %v623 = vmul.f32 %v618, %v618
        %v624 = vrot.slane %v619, 4
        %v625 = vadd.f32 %v619, %v624
        %v626 = vrot.slane %v625, 2
        %v627 = vadd.f32 %v625, %v626
        %v628 = vrot.slane %v627, 1
        %v629 = vadd.f32 %v627, %v628
        %v630 = vrot.slane %v620, 4
        %v631 = vadd.f32 %v620, %v630
        %v632 = vrot.slane %v631, 2
        %v633 = vadd.f32 %v631, %v632
        %v634 = vrot.slane %v633, 1
        %v635 = vadd.f32 %v633, %v634
        %v636 = vrot.slane %v621, 4
        %v637 = vadd.f32 %v621, %v636
        %v638 = vrot.slane %v637, 2
        %v639 = vadd.f32 %v637, %v638
        %v640 = vrot.slane %v639, 1
        %v641 = vadd.f32 %v639, %v640
        %v642 = vrot.slane %v622, 4
        %v643 = vadd.f32 %v622, %v642
        %v644 = vrot.slane %v643, 2
        %v645 = vadd.f32 %v643, %v644
        %v646 = vrot.slane %v645, 1
        %v647 = vadd.f32 %v645, %v646
        %v648 = vrot.slane %v623, 4
        %v649 = vadd.f32 %v623, %v648
        %v650 = vrot.slane %v649, 2
        %v651 = vadd.f32 %v649, %v650
        %v652 = vrot.slane %v651, 1
        %v653 = vadd.f32 %v651, %v652
        %v654 = vmul.f32 %v629, %v608
        %v655 = vmul.f32 %v635, %v608
        %v656 = vmul.f32 %v641, %v608
        %v657 = vmul.f32 %v647, %v608
        %v658 = vmul.f32 %v653, %v608
        %v659 = vadd.f32 %v654, 1e-05
        %v660 = vadd.f32 %v655, 1e-05
        %v661 = vadd.f32 %v656, 1e-05
        %v662 = vadd.f32 %v657, 1e-05
        %v663 = vadd.f32 %v658, 1e-05
        %v664 = vrsqrt.pop %v659
        %v665 = vmul.f32 %v664, %v659
        %v666 = vmul.f32 %v665, %v664
        %v667 = vmul.f32 0.5, %v666
        %v668 = vsub.f32 1.5, %v667
        %v669 = vmul.f32 %v664, %v668
        %vm670 = vweird.f32 %v659
        %vm671 = vweird.f32 %v664
        %vm672 = vmor %vm670, %vm671
        %v673 = vsel %vm672, %v664, %v669
        %v674 = vrsqrt.pop %v660
        %v675 = vmul.f32 %v674, %v660
        %v676 = vmul.f32 %v675, %v674
        %v677 = vmul.f32 0.5, %v676
        %v678 = vsub.f32 1.5, %v677
        %v679 = vmul.f32 %v674, %v678
        %vm680 = vweird.f32 %v660
        %vm681 = vweird.f32 %v674
        %vm682 = vmor %vm680, %vm681
        %v683 = vsel %vm682, %v674, %v679
        %v684 = vrsqrt.pop %v661
        %v685 = vmul.f32 %v684, %v661
        %v686 = vmul.f32 %v685, %v684
        %v687 = vmul.f32 0.5, %v686
        %v688 = vsub.f32 1.5, %v687
        %v689 = vmul.f32 %v684, %v688
        %vm690 = vweird.f32 %v661
        %vm691 = vweird.f32 %v684
        %vm692 = vmor %vm690, %vm691
        %v693 = vsel %vm692, %v684, %v689
        %v694 = vrsqrt.pop %v662
        %v695 = vmul.f32 %v694, %v662
        %v696 = vmul.f32 %v695, %v694
        %v697 = vmul.f32 0.5, %v696
        %v698 = vsub.f32 1.5, %v697
        %v699 = vmul.f32 %v694, %v698
        %vm700 = vweird.f32 %v662
        %vm701 = vweird.f32 %v694
        %vm702 = vmor %vm700, %vm701
        %v703 = vsel %vm702, %v694, %v699
        %v704 = vrsqrt.pop %v663
        %v705 = vmul.f32 %v704, %v663
        %v706 = vmul.f32 %v705, %v704
        %v707 = vmul.f32 0.5, %v706
        %v708 = vsub.f32 1.5, %v707
        %v709 = vmul.f32 %v704, %v708
        %vm710 = vweird.f32 %v663
        %vm711 = vweird.f32 %v704
        %vm712 = vmor %vm710, %vm711
        %v713 = vsel %vm712, %v704, %v709
        %v714 = vmul.f32 %v614, %v673
        %v715 = vmul.f32 %v615, %v683
        %v716 = vmul.f32 %v616, %v693
        %v717 = vmul.f32 %v617, %v703
        %v718 = vmul.f32 %v618, %v713
        %v720 = vperm.slane %v570, 0
        %v721 = vperm.slane %v570, 1
        %v722 = vperm.slane %v570, 2
        %v723 = vperm.slane %v570, 3
        %v724 = vperm.slane %v570, 4
        %v730 = vmul.f32 %v714, %v720
        %v731 = vmul.f32 %v715, %v721
        %v732 = vmul.f32 %v716, %v722
        %v733 = vmul.f32 %v717, %v723
        %v734 = vmul.f32 %v718, %v724
        %v736 = vperm.slane %v571, 0
        %v737 = vperm.slane %v571, 1
        %v738 = vperm.slane %v571, 2
        %v739 = vperm.slane %v571, 3
        %v740 = vperm.slane %v571, 4
        %v746 = vadd.f32 %v730, %v736
        %v747 = vadd.f32 %v731, %v737
        %v748 = vadd.f32 %v732, %v738
        %v749 = vadd.f32 %v733, %v739
        %v750 = vadd.f32 %v734, %v740
        %v751 = vmax.f32 %v746, 0.0
        %v752 = vmax.f32 %v747, 0.0
        %v753 = vmax.f32 %v748, 0.0
        %v754 = vmax.f32 %v749, 0.0
        %v755 = vmax.f32 %v750, 0.0
        %v756 = vpack.c.bf16 %v751, %v751
        %v757 = vpack.c.bf16 %v752, %v752
        %v758 = vpack.c.bf16 %v753, %v753
        %v759 = vpack.c.bf16 %v754, %v754
        %v760 = vpack.c.bf16 %v755, %v755
        %v761 = vld [vmem:[%s368] sm:$0xff]
        %v762 = vld [vmem:[%s368 + $0x8] sm:$0xff]
        %v763 = vld [vmem:[%s368 + $0x10] sm:$0xf]
        %v764 = vld [vmem:[%s368 + $0x14] sm:$0xff]
        %v765 = vld [vmem:[%s368 + $0x1c] sm:$0xff]
        %v766 = vld [vmem:[%s368 + $0x24] sm:$0xf]
        %v767 = vld [vmem:[%s368 + $0x28] sm:$0xff]
        %v768 = vld [vmem:[%s368 + $0x30] sm:$0xff]
        %v769 = vld [vmem:[%s368 + $0x38] sm:$0xf]
        %v770 = vld [vmem:[%s368 + $0x3c] sm:$0xff]
        %v771 = vld [vmem:[%s368 + $0x44] sm:$0xff]
        %v772 = vld [vmem:[%s368 + $0x4c] sm:$0xf]
        %v773 = vld [vmem:[%s368 + $0x50] sm:$0xff]
        %v774 = vld [vmem:[%s368 + $0x58] sm:$0xff]
        %v775 = vld [vmem:[%s368 + $0x60] sm:$0xf]
        %v776 = vld [vmem:[%s368 + $0x64] sm:$0xff]
        %v777 = vld [vmem:[%s368 + $0x6c] sm:$0xff]
        %v778 = vld [vmem:[%s368 + $0x74] sm:$0xf]
        %v779 = vld [vmem:[%s368 + $0x78] sm:$0xff]
        %v780 = vld [vmem:[%s368 + $0x80] sm:$0xff]
        %v781 = vld [vmem:[%s368 + $0x88] sm:$0xf]
        %v782 = vld [vmem:[%s368 + $0x8c] sm:$0xff]
        %v783 = vld [vmem:[%s368 + $0x94] sm:$0xff]
        %v784 = vld [vmem:[%s368 + $0x9c] sm:$0xf]
        %v785 = vld [vmem:[%s368 + $0xa0] sm:$0xff]
        %v786 = vld [vmem:[%s368 + $0xa8] sm:$0xff]
        %v787 = vld [vmem:[%s368 + $0xb0] sm:$0xf]
        %v788 = vld [vmem:[%s368 + $0xb4] sm:$0xff]
        %v789 = vld [vmem:[%s368 + $0xbc] sm:$0xff]
        %v790 = vld [vmem:[%s368 + $0xc4] sm:$0xf]
        %v791 = vld [vmem:[%s368 + $0xc8] sm:$0xff]
        %v792 = vld [vmem:[%s368 + $0xd0] sm:$0xff]
        %v793 = vld [vmem:[%s368 + $0xd8] sm:$0xf]
        %v794 = vld [vmem:[%s368 + $0xdc] sm:$0xff]
        %v795 = vld [vmem:[%s368 + $0xe4] sm:$0xff]
        %v796 = vld [vmem:[%s368 + $0xec] sm:$0xf]
        %v797 = vld [vmem:[%s368 + $0xf0] sm:$0xff]
        %v798 = vld [vmem:[%s368 + $0xf8] sm:$0xff]
        %v799 = vld [vmem:[%s368 + $0x100] sm:$0xf]
        %v800 = vld [vmem:[%s368 + $0x104] sm:$0xff]
        %v801 = vld [vmem:[%s368 + $0x10c] sm:$0xff]
        %v802 = vld [vmem:[%s368 + $0x114] sm:$0xf]
        %v803 = vld [vmem:[%s368 + $0x118] sm:$0xff]
        %v804 = vld [vmem:[%s368 + $0x120] sm:$0xff]
        %v805 = vld [vmem:[%s368 + $0x128] sm:$0xf]
        %v806 = vld [vmem:[%s368 + $0x12c] sm:$0xff]
        %v807 = vld [vmem:[%s368 + $0x134] sm:$0xff]
        %v808 = vld [vmem:[%s368 + $0x13c] sm:$0xf]
        %v809 = vld [vmem:[%s368 + $0x140] sm:$0xff]
        %v810 = vld [vmem:[%s368 + $0x148] sm:$0xff]
        %v811 = vld [vmem:[%s368 + $0x150] sm:$0xf]
        %v812 = vld [vmem:[%s368 + $0x154] sm:$0xff]
        %v813 = vld [vmem:[%s368 + $0x15c] sm:$0xff]
        %v814 = vld [vmem:[%s368 + $0x164] sm:$0xf]
        %v815 = vld [vmem:[%s368 + $0x168] sm:$0xff]
        %v816 = vld [vmem:[%s368 + $0x170] sm:$0xff]
        %v817 = vld [vmem:[%s368 + $0x178] sm:$0xf]
        %v818 = vld [vmem:[%s368 + $0x17c] sm:$0xff]
        %v819 = vld [vmem:[%s368 + $0x184] sm:$0xff]
        %v820 = vld [vmem:[%s368 + $0x18c] sm:$0xf]
        %v821 = vld [vmem:[%s368 + $0x190] sm:$0xff]
        %v822 = vld [vmem:[%s368 + $0x198] sm:$0xff]
        %v823 = vld [vmem:[%s368 + $0x1a0] sm:$0xf]
        %v824 = vld [vmem:[%s368 + $0x1a4] sm:$0xff]
        %v825 = vld [vmem:[%s368 + $0x1ac] sm:$0xff]
        %v826 = vld [vmem:[%s368 + $0x1b4] sm:$0xf]
        %v827 = vld [vmem:[%s368 + $0x1b8] sm:$0xff]
        %v828 = vld [vmem:[%s368 + $0x1c0] sm:$0xff]
        %v829 = vld [vmem:[%s368 + $0x1c8] sm:$0xf]
        %v830 = vld [vmem:[%s368 + $0x1cc] sm:$0xff]
        %v831 = vld [vmem:[%s368 + $0x1d4] sm:$0xff]
        %v832 = vld [vmem:[%s368 + $0x1dc] sm:$0xf]
        %v833 = vld [vmem:[%s368 + $0x1e0] sm:$0xff]
        %v834 = vld [vmem:[%s368 + $0x1e8] sm:$0xff]
        %v835 = vld [vmem:[%s368 + $0x1f0] sm:$0xf]
        %v836 = vld [vmem:[%s368 + $0x1f4] sm:$0xff]
        %v837 = vld [vmem:[%s368 + $0x1fc] sm:$0xff]
        %v838 = vld [vmem:[%s368 + $0x204] sm:$0xf]
        %v839 = vld [vmem:[%s368 + $0x208] sm:$0xff]
        %v840 = vld [vmem:[%s368 + $0x210] sm:$0xff]
        %v841 = vld [vmem:[%s368 + $0x218] sm:$0xf]
        %v842 = vld [vmem:[%s368 + $0x21c] sm:$0xff]
        %v843 = vld [vmem:[%s368 + $0x224] sm:$0xff]
        %v844 = vld [vmem:[%s368 + $0x22c] sm:$0xf]
        %v845 = vld [vmem:[%s368 + $0x230] sm:$0xff]
        %v846 = vld [vmem:[%s368 + $0x238] sm:$0xff]
        %v847 = vld [vmem:[%s368 + $0x240] sm:$0xf]
        %v848 = vld [vmem:[%s368 + $0x244] sm:$0xff]
        %v849 = vld [vmem:[%s368 + $0x24c] sm:$0xff]
        %v850 = vld [vmem:[%s368 + $0x254] sm:$0xf]
        %v851 = vld [vmem:[%s368 + $0x258] sm:$0xff]
        %v852 = vld [vmem:[%s368 + $0x260] sm:$0xff]
        %v853 = vld [vmem:[%s368 + $0x268] sm:$0xf]
        %v854 = vld [vmem:[%s368 + $0x26c] sm:$0xff]
        %v855 = vld [vmem:[%s368 + $0x274] sm:$0xff]
        %v856 = vld [vmem:[%s368 + $0x27c] sm:$0xf]
        %v857 = vld [vmem:[%s368 + $0x280] sm:$0xff]
        %v858 = vld [vmem:[%s368 + $0x288] sm:$0xff]
        %v859 = vld [vmem:[%s368 + $0x290] sm:$0xf]
        %v860 = vld [vmem:[%s368 + $0x294] sm:$0xff]
        %v861 = vld [vmem:[%s368 + $0x29c] sm:$0xff]
        %v862 = vld [vmem:[%s368 + $0x2a4] sm:$0xf]
        %v863 = vld [vmem:[%s368 + $0x2a8] sm:$0xff]
        %v864 = vld [vmem:[%s368 + $0x2b0] sm:$0xff]
        %v865 = vld [vmem:[%s368 + $0x2b8] sm:$0xf]
        %v866 = vld [vmem:[%s368 + $0x2bc] sm:$0xff]
        %v867 = vld [vmem:[%s368 + $0x2c4] sm:$0xff]
        %v868 = vld [vmem:[%s368 + $0x2cc] sm:$0xf]
        %v869 = vld [vmem:[%s368 + $0x2d0] sm:$0xff]
        %v870 = vld [vmem:[%s368 + $0x2d8] sm:$0xff]
        %v871 = vld [vmem:[%s368 + $0x2e0] sm:$0xf]
        %v872 = vld [vmem:[%s368 + $0x2e4] sm:$0xff]
        %v873 = vld [vmem:[%s368 + $0x2ec] sm:$0xff]
        %v874 = vld [vmem:[%s368 + $0x2f4] sm:$0xf]
        %v875 = vld [vmem:[%s368 + $0x2f8] sm:$0xff]
        %v876 = vld [vmem:[%s368 + $0x300] sm:$0xff]
        %v877 = vld [vmem:[%s368 + $0x308] sm:$0xf]
        %v878 = vld [vmem:[%s368 + $0x30c] sm:$0xff]
        %v879 = vld [vmem:[%s368 + $0x314] sm:$0xff]
        %v880 = vld [vmem:[%s368 + $0x31c] sm:$0xf]
        %v881 = vld [vmem:[%s368 + $0x320] sm:$0xff]
        %v882 = vld [vmem:[%s368 + $0x328] sm:$0xff]
        %v883 = vld [vmem:[%s368 + $0x330] sm:$0xf]
        %v884 = vld [vmem:[%s368 + $0x334] sm:$0xff]
        %v885 = vld [vmem:[%s368 + $0x33c] sm:$0xff]
        %v886 = vld [vmem:[%s368 + $0x344] sm:$0xf]
        %v887 = vld [vmem:[%s368 + $0x348] sm:$0xff]
        %v888 = vld [vmem:[%s368 + $0x350] sm:$0xff]
        %v889 = vld [vmem:[%s368 + $0x358] sm:$0xf]
        %v890 = vld [vmem:[%s368 + $0x35c] sm:$0xff]
        %v891 = vld [vmem:[%s368 + $0x364] sm:$0xff]
        %v892 = vld [vmem:[%s368 + $0x36c] sm:$0xf]
        %v893 = vld [vmem:[%s368 + $0x370] sm:$0xff]
        %v894 = vld [vmem:[%s368 + $0x378] sm:$0xff]
        %v895 = vld [vmem:[%s368 + $0x380] sm:$0xf]
        %v896 = vld [vmem:[%s368 + $0x384] sm:$0xff]
        %v897 = vld [vmem:[%s368 + $0x38c] sm:$0xff]
        %v898 = vld [vmem:[%s368 + $0x394] sm:$0xf]
        %v899 = vld [vmem:[%s368 + $0x398] sm:$0xff]
        %v900 = vld [vmem:[%s368 + $0x3a0] sm:$0xff]
        %v901 = vld [vmem:[%s368 + $0x3a8] sm:$0xf]
        %v902 = vld [vmem:[%s368 + $0x3ac] sm:$0xff]
        %v903 = vld [vmem:[%s368 + $0x3b4] sm:$0xff]
        %v904 = vld [vmem:[%s368 + $0x3bc] sm:$0xf]
        %v905 = vld [vmem:[%s368 + $0x3c0] sm:$0xff]
        %v906 = vld [vmem:[%s368 + $0x3c8] sm:$0xff]
        %v907 = vld [vmem:[%s368 + $0x3d0] sm:$0xf]
        %v908 = vld [vmem:[%s368 + $0x3d4] sm:$0xff]
        %v909 = vld [vmem:[%s368 + $0x3dc] sm:$0xff]
        %v910 = vld [vmem:[%s368 + $0x3e4] sm:$0xf]
        %v911 = vld [vmem:[%s368 + $0x3e8] sm:$0xff]
        %v912 = vld [vmem:[%s368 + $0x3f0] sm:$0xff]
        %v913 = vld [vmem:[%s368 + $0x3f8] sm:$0xf]
        %v914 = vld [vmem:[%s368 + $0x3fc] sm:$0xff]
        %v915 = vld [vmem:[%s368 + $0x404] sm:$0xff]
        %v916 = vld [vmem:[%s368 + $0x40c] sm:$0xf]
        %v917 = vld [vmem:[%s368 + $0x410] sm:$0xff]
        %v918 = vld [vmem:[%s368 + $0x418] sm:$0xff]
        %v919 = vld [vmem:[%s368 + $0x420] sm:$0xf]
        %v920 = vld [vmem:[%s368 + $0x424] sm:$0xff]
        %v921 = vld [vmem:[%s368 + $0x42c] sm:$0xff]
        %v922 = vld [vmem:[%s368 + $0x434] sm:$0xf]
        %v923 = vld [vmem:[%s368 + $0x438] sm:$0xff]
        %v924 = vld [vmem:[%s368 + $0x440] sm:$0xff]
        %v925 = vld [vmem:[%s368 + $0x448] sm:$0xf]
        %v926 = vld [vmem:[%s368 + $0x44c] sm:$0xff]
        %v927 = vld [vmem:[%s368 + $0x454] sm:$0xff]
        %v928 = vld [vmem:[%s368 + $0x45c] sm:$0xf]
        %v929 = vld [vmem:[%s368 + $0x460] sm:$0xff]
        %v930 = vld [vmem:[%s368 + $0x468] sm:$0xff]
        %v931 = vld [vmem:[%s368 + $0x470] sm:$0xf]
        %v932 = vld [vmem:[%s368 + $0x474] sm:$0xff]
        %v933 = vld [vmem:[%s368 + $0x47c] sm:$0xff]
        %v934 = vld [vmem:[%s368 + $0x484] sm:$0xf]
        %v935 = vld [vmem:[%s368 + $0x488] sm:$0xff]
        %v936 = vld [vmem:[%s368 + $0x490] sm:$0xff]
        %v937 = vld [vmem:[%s368 + $0x498] sm:$0xf]
        %v938 = vld [vmem:[%s368 + $0x49c] sm:$0xff]
        %v939 = vld [vmem:[%s368 + $0x4a4] sm:$0xff]
        %v940 = vld [vmem:[%s368 + $0x4ac] sm:$0xf]
        %v941 = vld [vmem:[%s368 + $0x4b0] sm:$0xff]
        %v942 = vld [vmem:[%s368 + $0x4b8] sm:$0xff]
        %v943 = vld [vmem:[%s368 + $0x4c0] sm:$0xf]
        %v944 = vld [vmem:[%s368 + $0x4c4] sm:$0xff]
        %v945 = vld [vmem:[%s368 + $0x4cc] sm:$0xff]
        %v946 = vld [vmem:[%s368 + $0x4d4] sm:$0xf]
        %v947 = vld [vmem:[%s368 + $0x4d8] sm:$0xff]
        %v948 = vld [vmem:[%s368 + $0x4e0] sm:$0xff]
        %v949 = vld [vmem:[%s368 + $0x4e8] sm:$0xf]
        %v950 = vld [vmem:[%s368 + $0x4ec] sm:$0xff]
        %v951 = vld [vmem:[%s368 + $0x4f4] sm:$0xff]
        %v952 = vld [vmem:[%s368 + $0x4fc] sm:$0xf]
        %v1145 = vunpack.c.l.b16 %v761
        %v1146 = vunpack.c.h.b16 %v761
        %v1147 = vunpack.c.l.b16 %v762
        %v1148 = vunpack.c.h.b16 %v762
        %v1149 = vunpack.c.l.b16 %v763
        %v1150 = vunpack.c.l.b16 %v764
        %v1151 = vunpack.c.h.b16 %v764
        %v1152 = vunpack.c.l.b16 %v765
        %v1153 = vunpack.c.h.b16 %v765
        %v1154 = vunpack.c.l.b16 %v766
        %v1155 = vunpack.c.l.b16 %v767
        %v1156 = vunpack.c.h.b16 %v767
        %v1157 = vunpack.c.l.b16 %v768
        %v1158 = vunpack.c.h.b16 %v768
        %v1159 = vunpack.c.l.b16 %v769
        %v1160 = vunpack.c.l.b16 %v770
        %v1161 = vunpack.c.h.b16 %v770
        %v1162 = vunpack.c.l.b16 %v771
        %v1163 = vunpack.c.h.b16 %v771
        %v1164 = vunpack.c.l.b16 %v772
        %v1165 = vunpack.c.l.b16 %v773
        %v1166 = vunpack.c.h.b16 %v773
        %v1167 = vunpack.c.l.b16 %v774
        %v1168 = vunpack.c.h.b16 %v774
        %v1169 = vunpack.c.l.b16 %v775
        %v1170 = vunpack.c.l.b16 %v776
        %v1171 = vunpack.c.h.b16 %v776
        %v1172 = vunpack.c.l.b16 %v777
        %v1173 = vunpack.c.h.b16 %v777
        %v1174 = vunpack.c.l.b16 %v778
        %v1175 = vunpack.c.l.b16 %v779
        %v1176 = vunpack.c.h.b16 %v779
        %v1177 = vunpack.c.l.b16 %v780
        %v1178 = vunpack.c.h.b16 %v780
        %v1179 = vunpack.c.l.b16 %v781
        %v1180 = vunpack.c.l.b16 %v782
        %v1181 = vunpack.c.h.b16 %v782
        %v1182 = vunpack.c.l.b16 %v783
        %v1183 = vunpack.c.h.b16 %v783
        %v1184 = vunpack.c.l.b16 %v784
        %v1185 = vunpack.c.l.b16 %v785
        %v1186 = vunpack.c.h.b16 %v785
        %v1187 = vunpack.c.l.b16 %v786
        %v1188 = vunpack.c.h.b16 %v786
        %v1189 = vunpack.c.l.b16 %v787
        %v1190 = vunpack.c.l.b16 %v788
        %v1191 = vunpack.c.h.b16 %v788
        %v1192 = vunpack.c.l.b16 %v789
        %v1193 = vunpack.c.h.b16 %v789
        %v1194 = vunpack.c.l.b16 %v790
        %v1195 = vunpack.c.l.b16 %v791
        %v1196 = vunpack.c.h.b16 %v791
        %v1197 = vunpack.c.l.b16 %v792
        %v1198 = vunpack.c.h.b16 %v792
        %v1199 = vunpack.c.l.b16 %v793
        %v1200 = vunpack.c.l.b16 %v794
        %v1201 = vunpack.c.h.b16 %v794
        %v1202 = vunpack.c.l.b16 %v795
        %v1203 = vunpack.c.h.b16 %v795
        %v1204 = vunpack.c.l.b16 %v796
        %v1205 = vunpack.c.l.b16 %v797
        %v1206 = vunpack.c.h.b16 %v797
        %v1207 = vunpack.c.l.b16 %v798
        %v1208 = vunpack.c.h.b16 %v798
        %v1209 = vunpack.c.l.b16 %v799
        %v1210 = vunpack.c.l.b16 %v800
        %v1211 = vunpack.c.h.b16 %v800
        %v1212 = vunpack.c.l.b16 %v801
        %v1213 = vunpack.c.h.b16 %v801
        %v1214 = vunpack.c.l.b16 %v802
        %v1215 = vunpack.c.l.b16 %v803
        %v1216 = vunpack.c.h.b16 %v803
        %v1217 = vunpack.c.l.b16 %v804
        %v1218 = vunpack.c.h.b16 %v804
        %v1219 = vunpack.c.l.b16 %v805
        %v1220 = vunpack.c.l.b16 %v806
        %v1221 = vunpack.c.h.b16 %v806
        %v1222 = vunpack.c.l.b16 %v807
        %v1223 = vunpack.c.h.b16 %v807
        %v1224 = vunpack.c.l.b16 %v808
        %v1225 = vunpack.c.l.b16 %v809
        %v1226 = vunpack.c.h.b16 %v809
        %v1227 = vunpack.c.l.b16 %v810
        %v1228 = vunpack.c.h.b16 %v810
        %v1229 = vunpack.c.l.b16 %v811
        %v1230 = vunpack.c.l.b16 %v812
        %v1231 = vunpack.c.h.b16 %v812
        %v1232 = vunpack.c.l.b16 %v813
        %v1233 = vunpack.c.h.b16 %v813
        %v1234 = vunpack.c.l.b16 %v814
        %v1235 = vunpack.c.l.b16 %v815
        %v1236 = vunpack.c.h.b16 %v815
        %v1237 = vunpack.c.l.b16 %v816
        %v1238 = vunpack.c.h.b16 %v816
        %v1239 = vunpack.c.l.b16 %v817
        %v1240 = vunpack.c.l.b16 %v818
        %v1241 = vunpack.c.h.b16 %v818
        %v1242 = vunpack.c.l.b16 %v819
        %v1243 = vunpack.c.h.b16 %v819
        %v1244 = vunpack.c.l.b16 %v820
        %v1245 = vunpack.c.l.b16 %v821
        %v1246 = vunpack.c.h.b16 %v821
        %v1247 = vunpack.c.l.b16 %v822
        %v1248 = vunpack.c.h.b16 %v822
        %v1249 = vunpack.c.l.b16 %v823
        %v1250 = vunpack.c.l.b16 %v824
        %v1251 = vunpack.c.h.b16 %v824
        %v1252 = vunpack.c.l.b16 %v825
        %v1253 = vunpack.c.h.b16 %v825
        %v1254 = vunpack.c.l.b16 %v826
        %v1255 = vunpack.c.l.b16 %v827
        %v1256 = vunpack.c.h.b16 %v827
        %v1257 = vunpack.c.l.b16 %v828
        %v1258 = vunpack.c.h.b16 %v828
        %v1259 = vunpack.c.l.b16 %v829
        %v1260 = vunpack.c.l.b16 %v830
        %v1261 = vunpack.c.h.b16 %v830
        %v1262 = vunpack.c.l.b16 %v831
        %v1263 = vunpack.c.h.b16 %v831
        %v1264 = vunpack.c.l.b16 %v832
        %v1265 = vunpack.c.l.b16 %v833
        %v1266 = vunpack.c.h.b16 %v833
        %v1267 = vunpack.c.l.b16 %v834
        %v1268 = vunpack.c.h.b16 %v834
        %v1269 = vunpack.c.l.b16 %v835
        %v1270 = vunpack.c.l.b16 %v836
        %v1271 = vunpack.c.h.b16 %v836
        %v1272 = vunpack.c.l.b16 %v837
        %v1273 = vunpack.c.h.b16 %v837
        %v1274 = vunpack.c.l.b16 %v838
        %v1275 = vunpack.c.l.b16 %v839
        %v1276 = vunpack.c.h.b16 %v839
        %v1277 = vunpack.c.l.b16 %v840
        %v1278 = vunpack.c.h.b16 %v840
        %v1279 = vunpack.c.l.b16 %v841
        %v1280 = vunpack.c.l.b16 %v842
        %v1281 = vunpack.c.h.b16 %v842
        %v1282 = vunpack.c.l.b16 %v843
        %v1283 = vunpack.c.h.b16 %v843
        %v1284 = vunpack.c.l.b16 %v844
        %v1285 = vunpack.c.l.b16 %v845
        %v1286 = vunpack.c.h.b16 %v845
        %v1287 = vunpack.c.l.b16 %v846
        %v1288 = vunpack.c.h.b16 %v846
        %v1289 = vunpack.c.l.b16 %v847
        %v1290 = vunpack.c.l.b16 %v848
        %v1291 = vunpack.c.h.b16 %v848
        %v1292 = vunpack.c.l.b16 %v849
        %v1293 = vunpack.c.h.b16 %v849
        %v1294 = vunpack.c.l.b16 %v850
        %v1295 = vunpack.c.l.b16 %v851
        %v1296 = vunpack.c.h.b16 %v851
        %v1297 = vunpack.c.l.b16 %v852
        %v1298 = vunpack.c.h.b16 %v852
        %v1299 = vunpack.c.l.b16 %v853
        %v1300 = vunpack.c.l.b16 %v854
        %v1301 = vunpack.c.h.b16 %v854
        %v1302 = vunpack.c.l.b16 %v855
        %v1303 = vunpack.c.h.b16 %v855
        %v1304 = vunpack.c.l.b16 %v856
        %v1305 = vunpack.c.l.b16 %v857
        %v1306 = vunpack.c.h.b16 %v857
        %v1307 = vunpack.c.l.b16 %v858
        %v1308 = vunpack.c.h.b16 %v858
        %v1309 = vunpack.c.l.b16 %v859
        %v1310 = vunpack.c.l.b16 %v860
        %v1311 = vunpack.c.h.b16 %v860
        %v1312 = vunpack.c.l.b16 %v861
        %v1313 = vunpack.c.h.b16 %v861
        %v1314 = vunpack.c.l.b16 %v862
        %v1315 = vunpack.c.l.b16 %v863
        %v1316 = vunpack.c.h.b16 %v863
        %v1317 = vunpack.c.l.b16 %v864
        %v1318 = vunpack.c.h.b16 %v864
        %v1319 = vunpack.c.l.b16 %v865
        %v1320 = vunpack.c.l.b16 %v866
        %v1321 = vunpack.c.h.b16 %v866
        %v1322 = vunpack.c.l.b16 %v867
        %v1323 = vunpack.c.h.b16 %v867
        %v1324 = vunpack.c.l.b16 %v868
        %v1325 = vunpack.c.l.b16 %v869
        %v1326 = vunpack.c.h.b16 %v869
        %v1327 = vunpack.c.l.b16 %v870
        %v1328 = vunpack.c.h.b16 %v870
        %v1329 = vunpack.c.l.b16 %v871
        %v1330 = vunpack.c.l.b16 %v872
        %v1331 = vunpack.c.h.b16 %v872
        %v1332 = vunpack.c.l.b16 %v873
        %v1333 = vunpack.c.h.b16 %v873
        %v1334 = vunpack.c.l.b16 %v874
        %v1335 = vunpack.c.l.b16 %v875
        %v1336 = vunpack.c.h.b16 %v875
        %v1337 = vunpack.c.l.b16 %v876
        %v1338 = vunpack.c.h.b16 %v876
        %v1339 = vunpack.c.l.b16 %v877
        %v1340 = vunpack.c.l.b16 %v878
        %v1341 = vunpack.c.h.b16 %v878
        %v1342 = vunpack.c.l.b16 %v879
        %v1343 = vunpack.c.h.b16 %v879
        %v1344 = vunpack.c.l.b16 %v880
        %v1345 = vunpack.c.l.b16 %v881
        %v1346 = vunpack.c.h.b16 %v881
        %v1347 = vunpack.c.l.b16 %v882
        %v1348 = vunpack.c.h.b16 %v882
        %v1349 = vunpack.c.l.b16 %v883
        %v1350 = vunpack.c.l.b16 %v884
        %v1351 = vunpack.c.h.b16 %v884
        %v1352 = vunpack.c.l.b16 %v885
        %v1353 = vunpack.c.h.b16 %v885
        %v1354 = vunpack.c.l.b16 %v886
        %v1355 = vunpack.c.l.b16 %v887
        %v1356 = vunpack.c.h.b16 %v887
        %v1357 = vunpack.c.l.b16 %v888
        %v1358 = vunpack.c.h.b16 %v888
        %v1359 = vunpack.c.l.b16 %v889
        %v1360 = vunpack.c.l.b16 %v890
        %v1361 = vunpack.c.h.b16 %v890
        %v1362 = vunpack.c.l.b16 %v891
        %v1363 = vunpack.c.h.b16 %v891
        %v1364 = vunpack.c.l.b16 %v892
        %v1365 = vunpack.c.l.b16 %v893
        %v1366 = vunpack.c.h.b16 %v893
        %v1367 = vunpack.c.l.b16 %v894
        %v1368 = vunpack.c.h.b16 %v894
        %v1369 = vunpack.c.l.b16 %v895
        %v1370 = vunpack.c.l.b16 %v896
        %v1371 = vunpack.c.h.b16 %v896
        %v1372 = vunpack.c.l.b16 %v897
        %v1373 = vunpack.c.h.b16 %v897
        %v1374 = vunpack.c.l.b16 %v898
        %v1375 = vunpack.c.l.b16 %v899
        %v1376 = vunpack.c.h.b16 %v899
        %v1377 = vunpack.c.l.b16 %v900
        %v1378 = vunpack.c.h.b16 %v900
        %v1379 = vunpack.c.l.b16 %v901
        %v1380 = vunpack.c.l.b16 %v902
        %v1381 = vunpack.c.h.b16 %v902
        %v1382 = vunpack.c.l.b16 %v903
        %v1383 = vunpack.c.h.b16 %v903
        %v1384 = vunpack.c.l.b16 %v904
        %v1385 = vunpack.c.l.b16 %v905
        %v1386 = vunpack.c.h.b16 %v905
        %v1387 = vunpack.c.l.b16 %v906
        %v1388 = vunpack.c.h.b16 %v906
        %v1389 = vunpack.c.l.b16 %v907
        %v1390 = vunpack.c.l.b16 %v908
        %v1391 = vunpack.c.h.b16 %v908
        %v1392 = vunpack.c.l.b16 %v909
        %v1393 = vunpack.c.h.b16 %v909
        %v1394 = vunpack.c.l.b16 %v910
        %v1395 = vunpack.c.l.b16 %v911
        %v1396 = vunpack.c.h.b16 %v911
        %v1397 = vunpack.c.l.b16 %v912
        %v1398 = vunpack.c.h.b16 %v912
        %v1399 = vunpack.c.l.b16 %v913
        %v1400 = vunpack.c.l.b16 %v914
        %v1401 = vunpack.c.h.b16 %v914
        %v1402 = vunpack.c.l.b16 %v915
        %v1403 = vunpack.c.h.b16 %v915
        %v1404 = vunpack.c.l.b16 %v916
        %v1405 = vunpack.c.l.b16 %v917
        %v1406 = vunpack.c.h.b16 %v917
        %v1407 = vunpack.c.l.b16 %v918
        %v1408 = vunpack.c.h.b16 %v918
        %v1409 = vunpack.c.l.b16 %v919
        %v1410 = vunpack.c.l.b16 %v920
        %v1411 = vunpack.c.h.b16 %v920
        %v1412 = vunpack.c.l.b16 %v921
        %v1413 = vunpack.c.h.b16 %v921
        %v1414 = vunpack.c.l.b16 %v922
        %v1415 = vunpack.c.l.b16 %v923
        %v1416 = vunpack.c.h.b16 %v923
        %v1417 = vunpack.c.l.b16 %v924
        %v1418 = vunpack.c.h.b16 %v924
        %v1419 = vunpack.c.l.b16 %v925
        %v1420 = vunpack.c.l.b16 %v926
        %v1421 = vunpack.c.h.b16 %v926
        %v1422 = vunpack.c.l.b16 %v927
        %v1423 = vunpack.c.h.b16 %v927
        %v1424 = vunpack.c.l.b16 %v928
        %v1425 = vunpack.c.l.b16 %v929
        %v1426 = vunpack.c.h.b16 %v929
        %v1427 = vunpack.c.l.b16 %v930
        %v1428 = vunpack.c.h.b16 %v930
        %v1429 = vunpack.c.l.b16 %v931
        %v1430 = vunpack.c.l.b16 %v932
        %v1431 = vunpack.c.h.b16 %v932
        %v1432 = vunpack.c.l.b16 %v933
        %v1433 = vunpack.c.h.b16 %v933
        %v1434 = vunpack.c.l.b16 %v934
        %v1435 = vunpack.c.l.b16 %v935
        %v1436 = vunpack.c.h.b16 %v935
        %v1437 = vunpack.c.l.b16 %v936
        %v1438 = vunpack.c.h.b16 %v936
        %v1439 = vunpack.c.l.b16 %v937
        %v1440 = vunpack.c.l.b16 %v938
        %v1441 = vunpack.c.h.b16 %v938
        %v1442 = vunpack.c.l.b16 %v939
        %v1443 = vunpack.c.h.b16 %v939
        %v1444 = vunpack.c.l.b16 %v940
        %v1445 = vunpack.c.l.b16 %v941
        %v1446 = vunpack.c.h.b16 %v941
        %v1447 = vunpack.c.l.b16 %v942
        %v1448 = vunpack.c.h.b16 %v942
        %v1449 = vunpack.c.l.b16 %v943
        %v1450 = vunpack.c.l.b16 %v944
        %v1451 = vunpack.c.h.b16 %v944
        %v1452 = vunpack.c.l.b16 %v945
        %v1453 = vunpack.c.h.b16 %v945
        %v1454 = vunpack.c.l.b16 %v946
        %v1455 = vunpack.c.l.b16 %v947
        %v1456 = vunpack.c.h.b16 %v947
        %v1457 = vunpack.c.l.b16 %v948
        %v1458 = vunpack.c.h.b16 %v948
        %v1459 = vunpack.c.l.b16 %v949
        %v1460 = vunpack.c.l.b16 %v950
        %v1461 = vunpack.c.h.b16 %v950
        %v1462 = vunpack.c.l.b16 %v951
        %v1463 = vunpack.c.h.b16 %v951
        %v1464 = vunpack.c.l.b16 %v952
        %v1465 = vpack.c.b16 %v1150, %v1145
        %v1466 = vpack.c.b16 %v1151, %v1146
        %v1467 = vpack.c.b16 %v1152, %v1147
        %v1468 = vpack.c.b16 %v1153, %v1148
        %v1469 = vpack.c.b16 %v1154, %v1149
        %v1470 = vpack.c.b16 %v1160, %v1155
        %v1471 = vpack.c.b16 %v1161, %v1156
        %v1472 = vpack.c.b16 %v1162, %v1157
        %v1473 = vpack.c.b16 %v1163, %v1158
        %v1474 = vpack.c.b16 %v1164, %v1159
        %v1475 = vpack.c.b16 %v1170, %v1165
        %v1476 = vpack.c.b16 %v1171, %v1166
        %v1477 = vpack.c.b16 %v1172, %v1167
        %v1478 = vpack.c.b16 %v1173, %v1168
        %v1479 = vpack.c.b16 %v1174, %v1169
        %v1480 = vpack.c.b16 %v1180, %v1175
        %v1481 = vpack.c.b16 %v1181, %v1176
        %v1482 = vpack.c.b16 %v1182, %v1177
        %v1483 = vpack.c.b16 %v1183, %v1178
        %v1484 = vpack.c.b16 %v1184, %v1179
        %v1485 = vpack.c.b16 %v1190, %v1185
        %v1486 = vpack.c.b16 %v1191, %v1186
        %v1487 = vpack.c.b16 %v1192, %v1187
        %v1488 = vpack.c.b16 %v1193, %v1188
        %v1489 = vpack.c.b16 %v1194, %v1189
        %v1490 = vpack.c.b16 %v1200, %v1195
        %v1491 = vpack.c.b16 %v1201, %v1196
        %v1492 = vpack.c.b16 %v1202, %v1197
        %v1493 = vpack.c.b16 %v1203, %v1198
        %v1494 = vpack.c.b16 %v1204, %v1199
        %v1495 = vpack.c.b16 %v1210, %v1205
        %v1496 = vpack.c.b16 %v1211, %v1206
        %v1497 = vpack.c.b16 %v1212, %v1207
        %v1498 = vpack.c.b16 %v1213, %v1208
        %v1499 = vpack.c.b16 %v1214, %v1209
        %v1500 = vpack.c.b16 %v1220, %v1215
        %v1501 = vpack.c.b16 %v1221, %v1216
        %v1502 = vpack.c.b16 %v1222, %v1217
        %v1503 = vpack.c.b16 %v1223, %v1218
        %v1504 = vpack.c.b16 %v1224, %v1219
        %v1505 = vpack.c.b16 %v1230, %v1225
        %v1506 = vpack.c.b16 %v1231, %v1226
        %v1507 = vpack.c.b16 %v1232, %v1227
        %v1508 = vpack.c.b16 %v1233, %v1228
        %v1509 = vpack.c.b16 %v1234, %v1229
        %v1510 = vpack.c.b16 %v1240, %v1235
        %v1511 = vpack.c.b16 %v1241, %v1236
        %v1512 = vpack.c.b16 %v1242, %v1237
        %v1513 = vpack.c.b16 %v1243, %v1238
        %v1514 = vpack.c.b16 %v1244, %v1239
        %v1515 = vpack.c.b16 %v1250, %v1245
        %v1516 = vpack.c.b16 %v1251, %v1246
        %v1517 = vpack.c.b16 %v1252, %v1247
        %v1518 = vpack.c.b16 %v1253, %v1248
        %v1519 = vpack.c.b16 %v1254, %v1249
        %v1520 = vpack.c.b16 %v1260, %v1255
        %v1521 = vpack.c.b16 %v1261, %v1256
        %v1522 = vpack.c.b16 %v1262, %v1257
        %v1523 = vpack.c.b16 %v1263, %v1258
        %v1524 = vpack.c.b16 %v1264, %v1259
        %v1525 = vpack.c.b16 %v1270, %v1265
        %v1526 = vpack.c.b16 %v1271, %v1266
        %v1527 = vpack.c.b16 %v1272, %v1267
        %v1528 = vpack.c.b16 %v1273, %v1268
        %v1529 = vpack.c.b16 %v1274, %v1269
        %v1530 = vpack.c.b16 %v1280, %v1275
        %v1531 = vpack.c.b16 %v1281, %v1276
        %v1532 = vpack.c.b16 %v1282, %v1277
        %v1533 = vpack.c.b16 %v1283, %v1278
        %v1534 = vpack.c.b16 %v1284, %v1279
        %v1535 = vpack.c.b16 %v1290, %v1285
        %v1536 = vpack.c.b16 %v1291, %v1286
        %v1537 = vpack.c.b16 %v1292, %v1287
        %v1538 = vpack.c.b16 %v1293, %v1288
        %v1539 = vpack.c.b16 %v1294, %v1289
        %v1540 = vpack.c.b16 %v1300, %v1295
        %v1541 = vpack.c.b16 %v1301, %v1296
        %v1542 = vpack.c.b16 %v1302, %v1297
        %v1543 = vpack.c.b16 %v1303, %v1298
        %v1544 = vpack.c.b16 %v1304, %v1299
        %v1545 = vpack.c.b16 %v1310, %v1305
        %v1546 = vpack.c.b16 %v1311, %v1306
        %v1547 = vpack.c.b16 %v1312, %v1307
        %v1548 = vpack.c.b16 %v1313, %v1308
        %v1549 = vpack.c.b16 %v1314, %v1309
        %v1550 = vpack.c.b16 %v1320, %v1315
        %v1551 = vpack.c.b16 %v1321, %v1316
        %v1552 = vpack.c.b16 %v1322, %v1317
        %v1553 = vpack.c.b16 %v1323, %v1318
        %v1554 = vpack.c.b16 %v1324, %v1319
        %v1555 = vpack.c.b16 %v1330, %v1325
        %v1556 = vpack.c.b16 %v1331, %v1326
        %v1557 = vpack.c.b16 %v1332, %v1327
        %v1558 = vpack.c.b16 %v1333, %v1328
        %v1559 = vpack.c.b16 %v1334, %v1329
        %v1560 = vpack.c.b16 %v1340, %v1335
        %v1561 = vpack.c.b16 %v1341, %v1336
        %v1562 = vpack.c.b16 %v1342, %v1337
        %v1563 = vpack.c.b16 %v1343, %v1338
        %v1564 = vpack.c.b16 %v1344, %v1339
        %v1565 = vpack.c.b16 %v1350, %v1345
        %v1566 = vpack.c.b16 %v1351, %v1346
        %v1567 = vpack.c.b16 %v1352, %v1347
        %v1568 = vpack.c.b16 %v1353, %v1348
        %v1569 = vpack.c.b16 %v1354, %v1349
        %v1570 = vpack.c.b16 %v1360, %v1355
        %v1571 = vpack.c.b16 %v1361, %v1356
        %v1572 = vpack.c.b16 %v1362, %v1357
        %v1573 = vpack.c.b16 %v1363, %v1358
        %v1574 = vpack.c.b16 %v1364, %v1359
        %v1575 = vpack.c.b16 %v1370, %v1365
        %v1576 = vpack.c.b16 %v1371, %v1366
        %v1577 = vpack.c.b16 %v1372, %v1367
        %v1578 = vpack.c.b16 %v1373, %v1368
        %v1579 = vpack.c.b16 %v1374, %v1369
        %v1580 = vpack.c.b16 %v1380, %v1375
        %v1581 = vpack.c.b16 %v1381, %v1376
        %v1582 = vpack.c.b16 %v1382, %v1377
        %v1583 = vpack.c.b16 %v1383, %v1378
        %v1584 = vpack.c.b16 %v1384, %v1379
        %v1585 = vpack.c.b16 %v1390, %v1385
        %v1586 = vpack.c.b16 %v1391, %v1386
        %v1587 = vpack.c.b16 %v1392, %v1387
        %v1588 = vpack.c.b16 %v1393, %v1388
        %v1589 = vpack.c.b16 %v1394, %v1389
        %v1590 = vpack.c.b16 %v1400, %v1395
        %v1591 = vpack.c.b16 %v1401, %v1396
        %v1592 = vpack.c.b16 %v1402, %v1397
        %v1593 = vpack.c.b16 %v1403, %v1398
        %v1594 = vpack.c.b16 %v1404, %v1399
        %v1595 = vpack.c.b16 %v1410, %v1405
        %v1596 = vpack.c.b16 %v1411, %v1406
        %v1597 = vpack.c.b16 %v1412, %v1407
        %v1598 = vpack.c.b16 %v1413, %v1408
        %v1599 = vpack.c.b16 %v1414, %v1409
        %v1600 = vpack.c.b16 %v1420, %v1415
        %v1601 = vpack.c.b16 %v1421, %v1416
        %v1602 = vpack.c.b16 %v1422, %v1417
        %v1603 = vpack.c.b16 %v1423, %v1418
        %v1604 = vpack.c.b16 %v1424, %v1419
        %v1605 = vpack.c.b16 %v1430, %v1425
        %v1606 = vpack.c.b16 %v1431, %v1426
        %v1607 = vpack.c.b16 %v1432, %v1427
        %v1608 = vpack.c.b16 %v1433, %v1428
        %v1609 = vpack.c.b16 %v1434, %v1429
        %v1610 = vpack.c.b16 %v1440, %v1435
        %v1611 = vpack.c.b16 %v1441, %v1436
        %v1612 = vpack.c.b16 %v1442, %v1437
        %v1613 = vpack.c.b16 %v1443, %v1438
        %v1614 = vpack.c.b16 %v1444, %v1439
        %v1615 = vpack.c.b16 %v1450, %v1445
        %v1616 = vpack.c.b16 %v1451, %v1446
        %v1617 = vpack.c.b16 %v1452, %v1447
        %v1618 = vpack.c.b16 %v1453, %v1448
        %v1619 = vpack.c.b16 %v1454, %v1449
        %v1620 = vpack.c.b16 %v1460, %v1455
        %v1621 = vpack.c.b16 %v1461, %v1456
        %v1622 = vpack.c.b16 %v1462, %v1457
        %v1623 = vpack.c.b16 %v1463, %v1458
        %v1624 = vpack.c.b16 %v1464, %v1459
        %1785 = vmatpush.bf16.xpose.msra.mxu0 %v1500
        %1786 = vmatpush.bf16.xpose.msra.mxu0 %v1495
        %1787 = vmatpush.bf16.xpose.msra.mxu0 %v1490
        %1788 = vmatpush.bf16.xpose.msra.mxu0 %v1485
        %1789 = vmatpush.bf16.xpose.msra.mxu0 %v1480
        %1790 = vmatpush.bf16.xpose.msra.mxu0 %v1475
        %1791 = vmatpush.bf16.xpose.msra.mxu0 %v1470
        %1792 = vmatpush.bf16.xpose.msra.mxu0 %v1465
        %1793 = vmatmul.bf16.gmra.mxu0 %v756
        %v1794 = vpop.f32.mrf.mxu0
        %v1795 = vadd.f32 0.0, %v1794
        %v1796 = vpop.f32.mrf.mxu0
        %1797 = vdwg.mxu0
        %1798 = vmatpush.bf16.xpose.msra.mxu0 %v1501
        %1799 = vmatpush.bf16.xpose.msra.mxu0 %v1496
        %1800 = vmatpush.bf16.xpose.msra.mxu0 %v1491
        %1801 = vmatpush.bf16.xpose.msra.mxu0 %v1486
        %1802 = vmatpush.bf16.xpose.msra.mxu0 %v1481
        %1803 = vmatpush.bf16.xpose.msra.mxu0 %v1476
        %1804 = vmatpush.bf16.xpose.msra.mxu0 %v1471
        %1805 = vmatpush.bf16.xpose.msra.mxu0 %v1466
        %1806 = vmatmul.bf16.gmra.mxu0 %v757
        %v1807 = vpop.f32.mrf.mxu0
        %v1808 = vadd.f32 %v1795, %v1807
        %v1809 = vpop.f32.mrf.mxu0
        %1810 = vdwg.mxu0
        %1811 = vmatpush.bf16.xpose.msra.mxu0 %v1502
        %1812 = vmatpush.bf16.xpose.msra.mxu0 %v1497
        %1813 = vmatpush.bf16.xpose.msra.mxu0 %v1492
        %1814 = vmatpush.bf16.xpose.msra.mxu0 %v1487
        %1815 = vmatpush.bf16.xpose.msra.mxu0 %v1482
        %1816 = vmatpush.bf16.xpose.msra.mxu0 %v1477
        %1817 = vmatpush.bf16.xpose.msra.mxu0 %v1472
        %1818 = vmatpush.bf16.xpose.msra.mxu0 %v1467
        %1819 = vmatmul.bf16.gmra.mxu0 %v758
        %v1820 = vpop.f32.mrf.mxu0
        %v1821 = vadd.f32 %v1808, %v1820
        %v1822 = vpop.f32.mrf.mxu0
        %1823 = vdwg.mxu0
        %1824 = vmatpush.bf16.xpose.msra.mxu0 %v1503
        %1825 = vmatpush.bf16.xpose.msra.mxu0 %v1498
        %1826 = vmatpush.bf16.xpose.msra.mxu0 %v1493
        %1827 = vmatpush.bf16.xpose.msra.mxu0 %v1488
        %1828 = vmatpush.bf16.xpose.msra.mxu0 %v1483
        %1829 = vmatpush.bf16.xpose.msra.mxu0 %v1478
        %1830 = vmatpush.bf16.xpose.msra.mxu0 %v1473
        %1831 = vmatpush.bf16.xpose.msra.mxu0 %v1468
        %1832 = vmatmul.bf16.gmra.mxu0 %v759
        %v1833 = vpop.f32.mrf.mxu0
        %v1834 = vadd.f32 %v1821, %v1833
        %v1835 = vpop.f32.mrf.mxu0
        %1836 = vdwg.mxu0
        %1837 = vmatpush.bf16.xpose.msra.mxu0 %v1504
        %1838 = vmatpush.bf16.xpose.msra.mxu0 %v1499
        %1839 = vmatpush.bf16.xpose.msra.mxu0 %v1494
        %1840 = vmatpush.bf16.xpose.msra.mxu0 %v1489
        %1841 = vmatpush.bf16.xpose.msra.mxu0 %v1484
        %1842 = vmatpush.bf16.xpose.msra.mxu0 %v1479
        %1843 = vmatpush.bf16.xpose.msra.mxu0 %v1474
        %1844 = vmatpush.bf16.xpose.msra.mxu0 %v1469
        %1845 = vmatmul.bf16.gmra.mxu0 %v760
        %v1846 = vpop.f32.mrf.mxu0
        %v1847 = vadd.f32 %v1834, %v1846
        %v1848 = vpop.f32.mrf.mxu0
        %1849 = vdwg.mxu0
        %1850 = vmatpush.bf16.xpose.msra.mxu0 %v1540
        %1851 = vmatpush.bf16.xpose.msra.mxu0 %v1535
        %1852 = vmatpush.bf16.xpose.msra.mxu0 %v1530
        %1853 = vmatpush.bf16.xpose.msra.mxu0 %v1525
        %1854 = vmatpush.bf16.xpose.msra.mxu0 %v1520
        %1855 = vmatpush.bf16.xpose.msra.mxu0 %v1515
        %1856 = vmatpush.bf16.xpose.msra.mxu0 %v1510
        %1857 = vmatpush.bf16.xpose.msra.mxu0 %v1505
        %1858 = vmatmul.bf16.gmra.mxu0 %v756
        %v1859 = vpop.f32.mrf.mxu0
        %v1860 = vadd.f32 0.0, %v1859
        %v1861 = vpop.f32.mrf.mxu0
        %1862 = vdwg.mxu0
        %1863 = vmatpush.bf16.xpose.msra.mxu0 %v1541
        %1864 = vmatpush.bf16.xpose.msra.mxu0 %v1536
        %1865 = vmatpush.bf16.xpose.msra.mxu0 %v1531
        %1866 = vmatpush.bf16.xpose.msra.mxu0 %v1526
        %1867 = vmatpush.bf16.xpose.msra.mxu0 %v1521
        %1868 = vmatpush.bf16.xpose.msra.mxu0 %v1516
        %1869 = vmatpush.bf16.xpose.msra.mxu0 %v1511
        %1870 = vmatpush.bf16.xpose.msra.mxu0 %v1506
        %1871 = vmatmul.bf16.gmra.mxu0 %v757
        %v1872 = vpop.f32.mrf.mxu0
        %v1873 = vadd.f32 %v1860, %v1872
        %v1874 = vpop.f32.mrf.mxu0
        %1875 = vdwg.mxu0
        %1876 = vmatpush.bf16.xpose.msra.mxu0 %v1542
        %1877 = vmatpush.bf16.xpose.msra.mxu0 %v1537
        %1878 = vmatpush.bf16.xpose.msra.mxu0 %v1532
        %1879 = vmatpush.bf16.xpose.msra.mxu0 %v1527
        %1880 = vmatpush.bf16.xpose.msra.mxu0 %v1522
        %1881 = vmatpush.bf16.xpose.msra.mxu0 %v1517
        %1882 = vmatpush.bf16.xpose.msra.mxu0 %v1512
        %1883 = vmatpush.bf16.xpose.msra.mxu0 %v1507
        %1884 = vmatmul.bf16.gmra.mxu0 %v758
        %v1885 = vpop.f32.mrf.mxu0
        %v1886 = vadd.f32 %v1873, %v1885
        %v1887 = vpop.f32.mrf.mxu0
        %1888 = vdwg.mxu0
        %1889 = vmatpush.bf16.xpose.msra.mxu0 %v1543
        %1890 = vmatpush.bf16.xpose.msra.mxu0 %v1538
        %1891 = vmatpush.bf16.xpose.msra.mxu0 %v1533
        %1892 = vmatpush.bf16.xpose.msra.mxu0 %v1528
        %1893 = vmatpush.bf16.xpose.msra.mxu0 %v1523
        %1894 = vmatpush.bf16.xpose.msra.mxu0 %v1518
        %1895 = vmatpush.bf16.xpose.msra.mxu0 %v1513
        %1896 = vmatpush.bf16.xpose.msra.mxu0 %v1508
        %1897 = vmatmul.bf16.gmra.mxu0 %v759
        %v1898 = vpop.f32.mrf.mxu0
        %v1899 = vadd.f32 %v1886, %v1898
        %v1900 = vpop.f32.mrf.mxu0
        %1901 = vdwg.mxu0
        %1902 = vmatpush.bf16.xpose.msra.mxu0 %v1544
        %1903 = vmatpush.bf16.xpose.msra.mxu0 %v1539
        %1904 = vmatpush.bf16.xpose.msra.mxu0 %v1534
        %1905 = vmatpush.bf16.xpose.msra.mxu0 %v1529
        %1906 = vmatpush.bf16.xpose.msra.mxu0 %v1524
        %1907 = vmatpush.bf16.xpose.msra.mxu0 %v1519
        %1908 = vmatpush.bf16.xpose.msra.mxu0 %v1514
        %1909 = vmatpush.bf16.xpose.msra.mxu0 %v1509
        %1910 = vmatmul.bf16.gmra.mxu0 %v760
        %v1911 = vpop.f32.mrf.mxu0
        %v1912 = vadd.f32 %v1899, %v1911
        %v1913 = vpop.f32.mrf.mxu0
        %1914 = vdwg.mxu0
        %1915 = vmatpush.bf16.xpose.msra.mxu0 %v1580
        %1916 = vmatpush.bf16.xpose.msra.mxu0 %v1575
        %1917 = vmatpush.bf16.xpose.msra.mxu0 %v1570
        %1918 = vmatpush.bf16.xpose.msra.mxu0 %v1565
        %1919 = vmatpush.bf16.xpose.msra.mxu0 %v1560
        %1920 = vmatpush.bf16.xpose.msra.mxu0 %v1555
        %1921 = vmatpush.bf16.xpose.msra.mxu0 %v1550
        %1922 = vmatpush.bf16.xpose.msra.mxu0 %v1545
        %1923 = vmatmul.bf16.gmra.mxu0 %v756
        %v1924 = vpop.f32.mrf.mxu0
        %v1925 = vadd.f32 0.0, %v1924
        %v1926 = vpop.f32.mrf.mxu0
        %1927 = vdwg.mxu0
        %1928 = vmatpush.bf16.xpose.msra.mxu0 %v1581
        %1929 = vmatpush.bf16.xpose.msra.mxu0 %v1576
        %1930 = vmatpush.bf16.xpose.msra.mxu0 %v1571
        %1931 = vmatpush.bf16.xpose.msra.mxu0 %v1566
        %1932 = vmatpush.bf16.xpose.msra.mxu0 %v1561
        %1933 = vmatpush.bf16.xpose.msra.mxu0 %v1556
        %1934 = vmatpush.bf16.xpose.msra.mxu0 %v1551
        %1935 = vmatpush.bf16.xpose.msra.mxu0 %v1546
        %1936 = vmatmul.bf16.gmra.mxu0 %v757
        %v1937 = vpop.f32.mrf.mxu0
        %v1938 = vadd.f32 %v1925, %v1937
        %v1939 = vpop.f32.mrf.mxu0
        %1940 = vdwg.mxu0
        %1941 = vmatpush.bf16.xpose.msra.mxu0 %v1582
        %1942 = vmatpush.bf16.xpose.msra.mxu0 %v1577
        %1943 = vmatpush.bf16.xpose.msra.mxu0 %v1572
        %1944 = vmatpush.bf16.xpose.msra.mxu0 %v1567
        %1945 = vmatpush.bf16.xpose.msra.mxu0 %v1562
        %1946 = vmatpush.bf16.xpose.msra.mxu0 %v1557
        %1947 = vmatpush.bf16.xpose.msra.mxu0 %v1552
        %1948 = vmatpush.bf16.xpose.msra.mxu0 %v1547
        %1949 = vmatmul.bf16.gmra.mxu0 %v758
        %v1950 = vpop.f32.mrf.mxu0
        %v1951 = vadd.f32 %v1938, %v1950
        %v1952 = vpop.f32.mrf.mxu0
        %1953 = vdwg.mxu0
        %1954 = vmatpush.bf16.xpose.msra.mxu0 %v1583
        %1955 = vmatpush.bf16.xpose.msra.mxu0 %v1578
        %1956 = vmatpush.bf16.xpose.msra.mxu0 %v1573
        %1957 = vmatpush.bf16.xpose.msra.mxu0 %v1568
        %1958 = vmatpush.bf16.xpose.msra.mxu0 %v1563
        %1959 = vmatpush.bf16.xpose.msra.mxu0 %v1558
        %1960 = vmatpush.bf16.xpose.msra.mxu0 %v1553
        %1961 = vmatpush.bf16.xpose.msra.mxu0 %v1548
        %1962 = vmatmul.bf16.gmra.mxu0 %v759
        %v1963 = vpop.f32.mrf.mxu0
        %v1964 = vadd.f32 %v1951, %v1963
        %v1965 = vpop.f32.mrf.mxu0
        %1966 = vdwg.mxu0
        %1967 = vmatpush.bf16.xpose.msra.mxu0 %v1584
        %1968 = vmatpush.bf16.xpose.msra.mxu0 %v1579
        %1969 = vmatpush.bf16.xpose.msra.mxu0 %v1574
        %1970 = vmatpush.bf16.xpose.msra.mxu0 %v1569
        %1971 = vmatpush.bf16.xpose.msra.mxu0 %v1564
        %1972 = vmatpush.bf16.xpose.msra.mxu0 %v1559
        %1973 = vmatpush.bf16.xpose.msra.mxu0 %v1554
        %1974 = vmatpush.bf16.xpose.msra.mxu0 %v1549
        %1975 = vmatmul.bf16.gmra.mxu0 %v760
        %v1976 = vpop.f32.mrf.mxu0
        %v1977 = vadd.f32 %v1964, %v1976
        %v1978 = vpop.f32.mrf.mxu0
        %1979 = vdwg.mxu0
        %1980 = vmatpush.bf16.xpose.msra.mxu0 %v1620
        %1981 = vmatpush.bf16.xpose.msra.mxu0 %v1615
        %1982 = vmatpush.bf16.xpose.msra.mxu0 %v1610
        %1983 = vmatpush.bf16.xpose.msra.mxu0 %v1605
        %1984 = vmatpush.bf16.xpose.msra.mxu0 %v1600
        %1985 = vmatpush.bf16.xpose.msra.mxu0 %v1595
        %1986 = vmatpush.bf16.xpose.msra.mxu0 %v1590
        %1987 = vmatpush.bf16.xpose.msra.mxu0 %v1585
        %1988 = vmatmul.bf16.gmra.mxu0 %v756
        %v1989 = vpop.f32.mrf.mxu0
        %v1990 = vadd.f32 0.0, %v1989
        %v1991 = vpop.f32.mrf.mxu0
        %1992 = vdwg.mxu0
        %1993 = vmatpush.bf16.xpose.msra.mxu0 %v1621
        %1994 = vmatpush.bf16.xpose.msra.mxu0 %v1616
        %1995 = vmatpush.bf16.xpose.msra.mxu0 %v1611
        %1996 = vmatpush.bf16.xpose.msra.mxu0 %v1606
        %1997 = vmatpush.bf16.xpose.msra.mxu0 %v1601
        %1998 = vmatpush.bf16.xpose.msra.mxu0 %v1596
        %1999 = vmatpush.bf16.xpose.msra.mxu0 %v1591
        %2000 = vmatpush.bf16.xpose.msra.mxu0 %v1586
        %2001 = vmatmul.bf16.gmra.mxu0 %v757
        %v2002 = vpop.f32.mrf.mxu0
        %v2003 = vadd.f32 %v1990, %v2002
        %v2004 = vpop.f32.mrf.mxu0
        %2005 = vdwg.mxu0
        %2006 = vmatpush.bf16.xpose.msra.mxu0 %v1622
        %2007 = vmatpush.bf16.xpose.msra.mxu0 %v1617
        %2008 = vmatpush.bf16.xpose.msra.mxu0 %v1612
        %2009 = vmatpush.bf16.xpose.msra.mxu0 %v1607
        %2010 = vmatpush.bf16.xpose.msra.mxu0 %v1602
        %2011 = vmatpush.bf16.xpose.msra.mxu0 %v1597
        %2012 = vmatpush.bf16.xpose.msra.mxu0 %v1592
        %2013 = vmatpush.bf16.xpose.msra.mxu0 %v1587
        %2014 = vmatmul.bf16.gmra.mxu0 %v758
        %v2015 = vpop.f32.mrf.mxu0
        %v2016 = vadd.f32 %v2003, %v2015
        %v2017 = vpop.f32.mrf.mxu0
        %2018 = vdwg.mxu0
        %2019 = vmatpush.bf16.xpose.msra.mxu0 %v1623
        %2020 = vmatpush.bf16.xpose.msra.mxu0 %v1618
        %2021 = vmatpush.bf16.xpose.msra.mxu0 %v1613
        %2022 = vmatpush.bf16.xpose.msra.mxu0 %v1608
        %2023 = vmatpush.bf16.xpose.msra.mxu0 %v1603
        %2024 = vmatpush.bf16.xpose.msra.mxu0 %v1598
        %2025 = vmatpush.bf16.xpose.msra.mxu0 %v1593
        %2026 = vmatpush.bf16.xpose.msra.mxu0 %v1588
        %2027 = vmatmul.bf16.gmra.mxu0 %v759
        %v2028 = vpop.f32.mrf.mxu0
        %v2029 = vadd.f32 %v2016, %v2028
        %v2030 = vpop.f32.mrf.mxu0
        %2031 = vdwg.mxu0
        %2032 = vmatpush.bf16.xpose.msra.mxu0 %v1624
        %2033 = vmatpush.bf16.xpose.msra.mxu0 %v1619
        %2034 = vmatpush.bf16.xpose.msra.mxu0 %v1614
        %2035 = vmatpush.bf16.xpose.msra.mxu0 %v1609
        %2036 = vmatpush.bf16.xpose.msra.mxu0 %v1604
        %2037 = vmatpush.bf16.xpose.msra.mxu0 %v1599
        %2038 = vmatpush.bf16.xpose.msra.mxu0 %v1594
        %2039 = vmatpush.bf16.xpose.msra.mxu0 %v1589
        %2040 = vmatmul.bf16.gmra.mxu0 %v760
        %v2041 = vpop.f32.mrf.mxu0
        %v2042 = vadd.f32 %v2029, %v2041
        %v2043 = vpop.f32.mrf.mxu0
        %2044 = vdwg.mxu0
        %v2045 = vld [vmem:[%s378] sm:$0xf]
        %v2046 = vld [vmem:[%s388] sm:$0xf]
        %v2047 = vrot.slane %v1847, 4
        %v2048 = vadd.f32 %v1847, %v2047
        %v2049 = vrot.slane %v2048, 2
        %v2050 = vadd.f32 %v2048, %v2049
        %v2051 = vrot.slane %v2050, 1
        %v2052 = vadd.f32 %v2050, %v2051
        %v2053 = vrot.slane %v1912, 4
        %v2054 = vadd.f32 %v1912, %v2053
        %v2055 = vrot.slane %v2054, 2
        %v2056 = vadd.f32 %v2054, %v2055
        %v2057 = vrot.slane %v2056, 1
        %v2058 = vadd.f32 %v2056, %v2057
        %v2059 = vrot.slane %v1977, 4
        %v2060 = vadd.f32 %v1977, %v2059
        %v2061 = vrot.slane %v2060, 2
        %v2062 = vadd.f32 %v2060, %v2061
        %v2063 = vrot.slane %v2062, 1
        %v2064 = vadd.f32 %v2062, %v2063
        %v2065 = vrot.slane %v2042, 4
        %v2066 = vadd.f32 %v2042, %v2065
        %v2067 = vrot.slane %v2066, 2
        %v2068 = vadd.f32 %v2066, %v2067
        %v2069 = vrot.slane %v2068, 1
        %v2070 = vadd.f32 %v2068, %v2069
        %v2071 = vmul.f32 %v2052, %v608
        %v2072 = vmul.f32 %v2058, %v608
        %v2073 = vmul.f32 %v2064, %v608
        %v2074 = vmul.f32 %v2070, %v608
        %v2075 = vsub.f32 %v1847, %v2071
        %v2076 = vsub.f32 %v1912, %v2072
        %v2077 = vsub.f32 %v1977, %v2073
        %v2078 = vsub.f32 %v2042, %v2074
        %v2079 = vmul.f32 %v2075, %v2075
        %v2080 = vmul.f32 %v2076, %v2076
        %v2081 = vmul.f32 %v2077, %v2077
        %v2082 = vmul.f32 %v2078, %v2078
        %v2083 = vrot.slane %v2079, 4
        %v2084 = vadd.f32 %v2079, %v2083
        %v2085 = vrot.slane %v2084, 2
        %v2086 = vadd.f32 %v2084, %v2085
        %v2087 = vrot.slane %v2086, 1
        %v2088 = vadd.f32 %v2086, %v2087
        %v2089 = vrot.slane %v2080, 4
        %v2090 = vadd.f32 %v2080, %v2089
        %v2091 = vrot.slane %v2090, 2
        %v2092 = vadd.f32 %v2090, %v2091
        %v2093 = vrot.slane %v2092, 1
        %v2094 = vadd.f32 %v2092, %v2093
        %v2095 = vrot.slane %v2081, 4
        %v2096 = vadd.f32 %v2081, %v2095
        %v2097 = vrot.slane %v2096, 2
        %v2098 = vadd.f32 %v2096, %v2097
        %v2099 = vrot.slane %v2098, 1
        %v2100 = vadd.f32 %v2098, %v2099
        %v2101 = vrot.slane %v2082, 4
        %v2102 = vadd.f32 %v2082, %v2101
        %v2103 = vrot.slane %v2102, 2
        %v2104 = vadd.f32 %v2102, %v2103
        %v2105 = vrot.slane %v2104, 1
        %v2106 = vadd.f32 %v2104, %v2105
        %v2107 = vmul.f32 %v2088, %v608
        %v2108 = vmul.f32 %v2094, %v608
        %v2109 = vmul.f32 %v2100, %v608
        %v2110 = vmul.f32 %v2106, %v608
        %v2111 = vadd.f32 %v2107, 1e-05
        %v2112 = vadd.f32 %v2108, 1e-05
        %v2113 = vadd.f32 %v2109, 1e-05
        %v2114 = vadd.f32 %v2110, 1e-05
        %v2115 = vrsqrt.pop %v2111
        %v2116 = vmul.f32 %v2115, %v2111
        %v2117 = vmul.f32 %v2116, %v2115
        %v2118 = vmul.f32 0.5, %v2117
        %v2119 = vsub.f32 1.5, %v2118
        %v2120 = vmul.f32 %v2115, %v2119
        %vm2121 = vweird.f32 %v2111
        %vm2122 = vweird.f32 %v2115
        %vm2123 = vmor %vm2121, %vm2122
        %v2124 = vsel %vm2123, %v2115, %v2120
        %v2125 = vrsqrt.pop %v2112
        %v2126 = vmul.f32 %v2125, %v2112
        %v2127 = vmul.f32 %v2126, %v2125
        %v2128 = vmul.f32 0.5, %v2127
        %v2129 = vsub.f32 1.5, %v2128
        %v2130 = vmul.f32 %v2125, %v2129
        %vm2131 = vweird.f32 %v2112
        %vm2132 = vweird.f32 %v2125
        %vm2133 = vmor %vm2131, %vm2132
        %v2134 = vsel %vm2133, %v2125, %v2130
        %v2135 = vrsqrt.pop %v2113
        %v2136 = vmul.f32 %v2135, %v2113
        %v2137 = vmul.f32 %v2136, %v2135
        %v2138 = vmul.f32 0.5, %v2137
        %v2139 = vsub.f32 1.5, %v2138
        %v2140 = vmul.f32 %v2135, %v2139
        %vm2141 = vweird.f32 %v2113
        %vm2142 = vweird.f32 %v2135
        %vm2143 = vmor %vm2141, %vm2142
        %v2144 = vsel %vm2143, %v2135, %v2140
        %v2145 = vrsqrt.pop %v2114
        %v2146 = vmul.f32 %v2145, %v2114
        %v2147 = vmul.f32 %v2146, %v2145
        %v2148 = vmul.f32 0.5, %v2147
        %v2149 = vsub.f32 1.5, %v2148
        %v2150 = vmul.f32 %v2145, %v2149
        %vm2151 = vweird.f32 %v2114
        %vm2152 = vweird.f32 %v2145
        %vm2153 = vmor %vm2151, %vm2152
        %v2154 = vsel %vm2153, %v2145, %v2150
        %v2155 = vmul.f32 %v2075, %v2124
        %v2156 = vmul.f32 %v2076, %v2134
        %v2157 = vmul.f32 %v2077, %v2144
        %v2158 = vmul.f32 %v2078, %v2154
        %v2160 = vperm.slane %v2045, 0
        %v2161 = vperm.slane %v2045, 1
        %v2162 = vperm.slane %v2045, 2
        %v2163 = vperm.slane %v2045, 3
        %v2168 = vmul.f32 %v2155, %v2160
        %v2169 = vmul.f32 %v2156, %v2161
        %v2170 = vmul.f32 %v2157, %v2162
        %v2171 = vmul.f32 %v2158, %v2163
        %v2173 = vperm.slane %v2046, 0
        %v2174 = vperm.slane %v2046, 1
        %v2175 = vperm.slane %v2046, 2
        %v2176 = vperm.slane %v2046, 3
        %v2181 = vadd.f32 %v2168, %v2173
        %v2182 = vadd.f32 %v2169, %v2174
        %v2183 = vadd.f32 %v2170, %v2175
        %v2184 = vadd.f32 %v2171, %v2176
        %v2185 = vmax.f32 %v2181, 0.0
        %v2186 = vmax.f32 %v2182, 0.0
        %v2187 = vmax.f32 %v2183, 0.0
        %v2188 = vmax.f32 %v2184, 0.0
        %2189 = vst [vmem:[%s429] sm:$0xff] %v2185
        %2190 = vst [vmem:[%s429 + $0x8] sm:$0xff] %v2186
        %2191 = vst [vmem:[%s429 + $0x10] sm:$0xff] %v2187
        %2192 = vst [vmem:[%s429 + $0x18] sm:$0xff] %v2188
        %s2193 = sand.u32 %s194, 1
        %s2194 = scalar_lea.sflag [#allocation4], %s2193
        %s2195 = sand.u32 %s194, 1
        %s2196 = smul.addr %s2195, 32
        %s2197 = scalar_lea.vmem [#allocation13], %s2196
        // Predicated region
        $region77: #{tpu_custom_call.1} parent=47 // pred_check
          %p2198 = pneg %p204
        $region78: #{tpu_custom_call.1} parent=47 // pred_check_branch
          %2200 = sbr.rel (%p2198) target = $region80
        $region79: #{tpu_custom_call.1} parent=47 // pred_region
          %s2201 = smul.u32 4, %s24
          %2203 = vsyncadd %s2194, 0
          %s2204 = smul.addr %s2201, 8
          %s2205 = scalar_lea.hbm %s7, %s2204
          %s2207 = sshll.u32 %s2197, 4
          %s2208 = int_to_ptr.vmem [resolvable:$true] %s2207
          %s2209 = sshll.u32 %s2205, 4
          %s2210 = int_to_ptr.hbm [resolvable:$true] %s2209
          %2212 = dma.vmem_to_hbm [thread:$0]  %s2208, 512, %s2210, %s2194
        $region80: #{tpu_custom_call.1} parent=47 // pred_fallthru
          _
      $region48: #{tpu_custom_call.1} parent=5 // pred_fallthru
        _
      %p2213 = scmp.le.s32.totalorder 2, %s19
      // Predicated region
      $region81: #{tpu_custom_call.1} parent=5 // pred_check
        %p2214 = pneg %p2213
      $region82: #{tpu_custom_call.1} parent=5 // pred_check_branch
        %2216 = sbr.rel (%p2214) target = $region84
      $region83: #{tpu_custom_call.1} parent=5 // pred_region
        %s2217 = ssub.s32 %s19, 2
        // Predicated region
        $region85: #{tpu_custom_call.1} parent=83 // pred_check
          %p2218 = pneg %p210
        $region86: #{tpu_custom_call.1} parent=83 // pred_check_branch
          %2220 = sbr.rel (%p2218) target = $region88
        $region87: #{tpu_custom_call.1} parent=83 // pred_region
          %s2221 = sand.u32 %s195, 1
          %s2222 = scalar_lea.sflag [#allocation4], %s2221
          %s2223 = sand.u32 %s195, 1
          %s2224 = smul.addr %s2223, 32
          %s2225 = scalar_lea.vmem [#allocation13], %s2224
          %2227 = dma.done %s2222, 512
        $region88: #{tpu_custom_call.1} parent=83 // pred_fallthru
          _
      $region84: #{tpu_custom_call.1} parent=5 // pred_fallthru
        _
    $region6: #{tpu_custom_call.1} parent=1 // loop_footer
      %s23 = sadd.s32 1, %s19
    $region7: #{tpu_custom_call.1} parent=1 // loop_footer_branch
      %18 = sbr.rel target = $region3
    $region8: #{tpu_custom_call.1} parent=1 // loop_exit
      _
    %2228 = vsyncpa [#allocation3], 1
    %s2229 = scalar_lea.sflag [#allocation3], 1
    %2230 = vsyncpa %s2229, 1
    %2231 = vsyncpa [#allocation6], 1
    %2232 = vsyncpa [#allocation9], 1
    %2233 = vsyncpa [#allocation4], 1
    %s2234 = scalar_lea.sflag [#allocation4], 1
    %2235 = vsyncpa %s2234, 1

</llo_original>
